<compile_context>
chip_gen: v7x
topology: tpu7x:2x2x1
jax: 0.10.0
libtpu: 0.0.40
codegen_flags: <defaults>
</compile_context>

<pallas_src>
import functools

import jax
import jax.numpy as jnp
from jax.experimental import pallas as pl
from jax.experimental.pallas import tpu as pltpu


def _round_up(x, m):
    return (x + m - 1) // m * m


# ---------------------------------------------------------------------------
# Fused diffusion + 1x1-conv kernel: one tile of `tile_b` (n, l) row-groups.
# ---------------------------------------------------------------------------
def _gcn_fused_kernel(x_ref, a_ref, w_ref, o_ref, h_ref, *,
                      support_len, order, tile_b, C, c_out, V):
    """
    x_ref : (tile_b*C, V)           rows (t, c) with t = (n, l), cols = nodes v
    a_ref : (S, V, V)               adjacency stack, VMEM-resident
    w_ref : (J, c_out, C)           1x1-conv weight split per concat block, resident
    o_ref : (tile_b*c_out, V)       rows (t, o), cols v  (full-lane-width stores)
    h_ref : (S*order, tile_b*C, V)  diffusion-chain scratch (compute dtype)
    """
    S = support_len
    J = order * S + 1
    cdt = h_ref.dtype

    # ---- diffusion chain: fat (tile_b*C, V) @ (V, V) MXU matmuls -----------
    idx = 0
    for s in range(S):                              # static loop over supports
        a_s = a_ref[s]                              # (V, V)
        h = x_ref[...]
        for _ in range(order):                      # static diffusion order
            h = jnp.dot(h, a_s, preferred_element_type=jnp.float32).astype(cdt)
            h_ref[idx] = h                          # full-tile, unmasked store
            idx += 1

    # ---- fused 1x1 conv: per-(n,l) channel contraction on the MXU ----------
    #   y_t[o, v] = sum_j  W_j[o, :] @ H_j[t*C:(t+1)*C, :]     (H_0 = x)
    # Output rows are (t, o): no masked lane stores, no XLU relayout.
    w_blocks = [w_ref[j] for j in range(J)]         # tiny, hoisted out of loop

    @pl.loop(0, tile_b)
    def _(t):
        ri = pl.multiple_of(t * C, C)               # sublane-aligned (C % 8 == 0)
        ro = pl.multiple_of(t * c_out, c_out)
        acc = jnp.dot(w_blocks[0], x_ref[pl.ds(ri, C), :],
                      preferred_element_type=jnp.float32)
        for j in range(1, J):                       # static loop over blocks
            acc = acc + jnp.dot(w_blocks[j], h_ref[j - 1, pl.ds(ri, C), :],
                                preferred_element_type=jnp.float32)
        o_ref[pl.ds(ro, c_out), :] = acc.astype(o_ref.dtype)


# ---------------------------------------------------------------------------
# gcn.forward wrapper
# ---------------------------------------------------------------------------
def gcn_forward(x, supports, weight, order=2,
                compute_dtype=jnp.bfloat16, out_dtype=None,
                tile_b=None, vmem_budget_bytes=16 * 1024 * 1024):
    """
    x        : (N, C, V, L) float array (PyTorch NCVL layout)
    supports : list of (V, V) adjacency matrices
    weight   : (c_out, (order*len(supports)+1)*C) squeezed 1x1-conv weight
    Returns  : (N, c_out, V, L)
    """
    N, C, V, L = x.shape
    S = len(supports)
    assert S >= 1 and order >= 1
    J = order * S + 1
    c_out = weight.shape[0]
    assert weight.shape == (c_out, J * C)
    if out_dtype is None:
        out_dtype = compute_dtype
    B = N * L

    csz = jnp.dtype(compute_dtype).itemsize
    osz = jnp.dtype(out_dtype).itemsize

    # Zero-pad channel counts to sublane multiples (odd C / c_out safe).
    Cp = _round_up(C, 8)
    Op = _round_up(c_out, 8)

    # ---- tile_b from a VMEM byte budget (amortizes per-grid-step overhead) --
    per_t = V * (2 * Cp * csz              # double-buffered input block
                 + 2 * Op * osz            # double-buffered output block
                 + S * order * Cp * csz    # diffusion-chain scratch
                 + 2 * Cp * 4)             # headroom for f32 matmul temporaries
    if tile_b is None:
        tile_b = max(1, vmem_budget_bytes // per_t)
    tile_b = int(min(tile_b, max(1, pl.cdiv(B, 2))))   # >= 2 grid steps
    grid = int(pl.cdiv(B, tile_b))
    if grid > 1 and grid % 2:                          # even grid for v7x 2-TC
        grid += 1
        tile_b = int(pl.cdiv(B, grid))
    Bp = grid * tile_b                                 # padded row-group count

    # ---- one layout copy each way (API-compat only; see header note) --------
    xp = x
    if Cp != C:
        xp = jnp.pad(xp, ((0, 0), (0, Cp - C), (0, 0), (0, 0)))
    x2d = jnp.transpose(xp, (0, 3, 1, 2)).reshape(B * Cp, V).astype(compute_dtype)
    if Bp != B:
        x2d = jnp.pad(x2d, ((0, (Bp - B) * Cp), (0, 0)))   # zero rows: harmless

    a_stack = jnp.stack(supports, axis=0).astype(compute_dtype)      # (S, V, V)

    w3 = weight.reshape(c_out, J, C)
    if Cp != C or Op != c_out:
        w3 = jnp.pad(w3, ((0, Op - c_out), (0, 0), (0, Cp - C)))
    w3 = jnp.transpose(w3, (1, 0, 2)).astype(compute_dtype)          # (J, Op, Cp)

    est_vmem = tile_b * per_t + (S * V * V + J * Op * Cp) * csz
    vmem_limit = int(min(48 * 1024 * 1024, max(32 * 1024 * 1024, 2 * est_vmem)))

    kernel = functools.partial(_gcn_fused_kernel, support_len=S, order=order,
                               tile_b=tile_b, C=Cp, c_out=Op, V=V)

    out2d = pl.pallas_call(
        kernel,
        out_shape=jax.ShapeDtypeStruct((Bp * Op, V), out_dtype),
        grid=(grid,),
        in_specs=[
            pl.BlockSpec((tile_b * Cp, V), lambda i: (i, 0)),   # tiled activations
            pl.BlockSpec((S, V, V), lambda i: (0, 0, 0)),       # resident adjacency
            pl.BlockSpec((J, Op, Cp), lambda i: (0, 0, 0)),     # resident weight
        ],
        out_specs=pl.BlockSpec((tile_b * Op, V), lambda i: (i, 0)),
        scratch_shapes=[pltpu.VMEM((S * order, tile_b * Cp, V), compute_dtype)],
        compiler_params=pltpu.CompilerParams(
            dimension_semantics=("parallel",),                  # megacore-friendly
            vmem_limit_bytes=vmem_limit),
    )(x2d, a_stack, w3)

    # (Bp*Op, V) rows (t, o)  ->  (N, c_out, V, L)
    y = out2d.reshape(Bp, Op, V)[:B, :c_out]
    y = y.reshape(N, L, c_out, V).transpose(0, 2, 3, 1)

    # F.dropout(h, p, training=self.training): eval-mode identity here.
    # TODO(synk): training-mode stochastic dropout (pltpu.prng_seed / prng_random_bits).
    return y


# ---------------------------------------------------------------------------
# Pure-JAX reference (mirrors the PyTorch forward exactly, in f32)
# ---------------------------------------------------------------------------
def gcn_reference(x, supports, weight, order=2):
    out = [x]
    for a in supports:
        x1 = jnp.einsum('ncvl,vw->ncwl', x, a)
        out.append(x1)
        for _ in range(2, order + 1):
            x2 = jnp.einsum('ncvl,vw->ncwl', x1, a)
            out.append(x2)
            x1 = x2
    h = jnp.concatenate(out, axis=1)
    return jnp.einsum('oc,ncvl->novl', weight, h)      # 1x1 conv, no bias


if __name__ == "__main__":
    key = jax.random.PRNGKey(0)
    N, C, V, L = 2, 16, 16, 8           # batch, in-channels, nodes, time
    support_len, order, c_out = 3, 2, 16
    c_in_total = (order * support_len + 1) * C

    k_x, k_a, k_w = jax.random.split(key, 3)
    x = jax.random.normal(k_x, (N, C, V, L), dtype=jnp.float32)
    supports = [
        jax.nn.softmax(jax.random.normal(k, (V, V), dtype=jnp.float32), axis=-1)
        for k in jax.random.split(k_a, support_len)
    ]
    # Conv2d-style deterministic init (uniform +/- 1/sqrt(fan_in)), 1x1 kernel squeezed.
    bound = 1.0 / (c_in_total ** 0.5)
    weight = jax.random.uniform(k_w, (c_out, c_in_total), jnp.float32,
                                -bound, bound)

    y_ref = gcn_reference(x, supports, weight, order=order)

    # f32 compute path: tight numerical check.
    y32 = jax.block_until_ready(
        gcn_forward(x, supports, weight, order=order,
                    compute_dtype=jnp.float32))
    err32 = float(jnp.max(jnp.abs(y32 - y_ref)))
    assert err32 < 1e-3, f"f32 max abs err {err32}"

    # bf16 MXU-operand + bf16-output path (f32 accumulation): loose check
    # (bf16 rounding of x/A/W, the chain, and the stored output).
    ybf = jax.block_until_ready(
        gcn_forward(x, supports, weight, order=order,
                    compute_dtype=jnp.bfloat16))
    errbf = float(jnp.max(jnp.abs(ybf.astype(jnp.float32) - y_ref)))
    assert errbf < 1e-1, f"bf16 max abs err {errbf}"

    print("KERNEL_OK")
</pallas_src>

<mosaic_0001>
module attributes {stable_mosaic.version = 11 : i64} {
  func.func @_gcn_fused_kernel(%arg0: i32, %arg1: memref<128x16xf32, #tpu.memory_space<vmem>>, %arg2: memref<3x16x16xf32, #tpu.memory_space<vmem>>, %arg3: memref<7x16x16xf32, #tpu.memory_space<vmem>>, %arg4: memref<128x16xf32, #tpu.memory_space<vmem>>, %arg5: memref<6x128x16xf32, #tpu.memory_space<vmem>>) attributes {dimension_semantics = [#tpu.dimension_semantics<parallel>], iteration_bounds = array<i64: 2>, scalar_prefetch = 0 : i64, scratch_operands = 1 : i64, tpu.core_type = #tpu.core_type<tc>, window_params = [{transform_indices = @transform_0, window_bounds = array<i64: 128, 16>}, {pipeline_mode = #tpu.pipeline_mode<synchronous>, transform_indices = @transform_1, window_bounds = array<i64: 3, 16, 16>}, {pipeline_mode = #tpu.pipeline_mode<synchronous>, transform_indices = @transform_2, window_bounds = array<i64: 7, 16, 16>}, {transform_indices = @transform_3, window_bounds = array<i64: 128, 16>}]} {
    %c0 = arith.constant 0 : index
    %c0_0 = arith.constant 0 : index
    %c0_1 = arith.constant 0 : index
    %0 = vector.load %arg2[%c0, %c0_0, %c0_1] : memref<3x16x16xf32, #tpu.memory_space<vmem>>, vector<1x16x16xf32>
    %1 = vector.shape_cast %0 : vector<1x16x16xf32> to vector<16x16xf32>
    %c0_2 = arith.constant 0 : index
    %c0_3 = arith.constant 0 : index
    %2 = vector.load %arg1[%c0_2, %c0_3] : memref<128x16xf32, #tpu.memory_space<vmem>>, vector<128x16xf32>
    %cst = arith.constant dense<0.000000e+00> : vector<128x16xf32>
    %3 = tpu.matmul %2, %1, %cst {dimension_numbers = #tpu.dot_dimension_numbers<[1], [0], [0], [1], [0, 0, 1, 1], [], []>} : vector<128x16xf32>, vector<16x16xf32>, vector<128x16xf32> -> vector<128x16xf32>
    %c0_4 = arith.constant 0 : index
    %c0_5 = arith.constant 0 : index
    %c0_6 = arith.constant 0 : index
    %4 = vector.load %arg5[%c0_4, %c0_5, %c0_6] : memref<6x128x16xf32, #tpu.memory_space<vmem>>, vector<1x128x16xf32>
    %5 = vector.shape_cast %4 : vector<1x128x16xf32> to vector<128x16xf32>
    %6 = vector.shape_cast %3 : vector<128x16xf32> to vector<1x128x16xf32>
    tpu.vector_store %arg5[%c0_4, %c0_5, %c0_6], %6 {strides = array<i32>} : memref<6x128x16xf32, #tpu.memory_space<vmem>>, vector<1x128x16xf32>,
    %cst_7 = arith.constant dense<0.000000e+00> : vector<128x16xf32>
    %7 = tpu.matmul %3, %1, %cst_7 {dimension_numbers = #tpu.dot_dimension_numbers<[1], [0], [0], [1], [0, 0, 1, 1], [], []>} : vector<128x16xf32>, vector<16x16xf32>, vector<128x16xf32> -> vector<128x16xf32>
    %c1 = arith.constant 1 : index
    %c0_8 = arith.constant 0 : index
    %c0_9 = arith.constant 0 : index
    %8 = vector.load %arg5[%c1, %c0_8, %c0_9] : memref<6x128x16xf32, #tpu.memory_space<vmem>>, vector<1x128x16xf32>
    %9 = vector.shape_cast %8 : vector<1x128x16xf32> to vector<128x16xf32>
    %10 = vector.shape_cast %7 : vector<128x16xf32> to vector<1x128x16xf32>
    tpu.vector_store %arg5[%c1, %c0_8, %c0_9], %10 {strides = array<i32>} : memref<6x128x16xf32, #tpu.memory_space<vmem>>, vector<1x128x16xf32>,
    %c1_10 = arith.constant 1 : index
    %c0_11 = arith.constant 0 : index
    %c0_12 = arith.constant 0 : index
    %11 = vector.load %arg2[%c1_10, %c0_11, %c0_12] : memref<3x16x16xf32, #tpu.memory_space<vmem>>, vector<1x16x16xf32>
    %12 = vector.shape_cast %11 : vector<1x16x16xf32> to vector<16x16xf32>
    %c0_13 = arith.constant 0 : index
    %c0_14 = arith.constant 0 : index
    %13 = vector.load %arg1[%c0_13, %c0_14] : memref<128x16xf32, #tpu.memory_space<vmem>>, vector<128x16xf32>
    %cst_15 = arith.constant dense<0.000000e+00> : vector<128x16xf32>
    %14 = tpu.matmul %13, %12, %cst_15 {dimension_numbers = #tpu.dot_dimension_numbers<[1], [0], [0], [1], [0, 0, 1, 1], [], []>} : vector<128x16xf32>, vector<16x16xf32>, vector<128x16xf32> -> vector<128x16xf32>
    %c2 = arith.constant 2 : index
    %c0_16 = arith.constant 0 : index
    %c0_17 = arith.constant 0 : index
    %15 = vector.load %arg5[%c2, %c0_16, %c0_17] : memref<6x128x16xf32, #tpu.memory_space<vmem>>, vector<1x128x16xf32>
    %16 = vector.shape_cast %15 : vector<1x128x16xf32> to vector<128x16xf32>
    %17 = vector.shape_cast %14 : vector<128x16xf32> to vector<1x128x16xf32>
    tpu.vector_store %arg5[%c2, %c0_16, %c0_17], %17 {strides = array<i32>} : memref<6x128x16xf32, #tpu.memory_space<vmem>>, vector<1x128x16xf32>,
    %cst_18 = arith.constant dense<0.000000e+00> : vector<128x16xf32>
    %18 = tpu.matmul %14, %12, %cst_18 {dimension_numbers = #tpu.dot_dimension_numbers<[1], [0], [0], [1], [0, 0, 1, 1], [], []>} : vector<128x16xf32>, vector<16x16xf32>, vector<128x16xf32> -> vector<128x16xf32>
    %c3 = arith.constant 3 : index
    %c0_19 = arith.constant 0 : index
    %c0_20 = arith.constant 0 : index
    %19 = vector.load %arg5[%c3, %c0_19, %c0_20] : memref<6x128x16xf32, #tpu.memory_space<vmem>>, vector<1x128x16xf32>
    %20 = vector.shape_cast %19 : vector<1x128x16xf32> to vector<128x16xf32>
    %21 = vector.shape_cast %18 : vector<128x16xf32> to vector<1x128x16xf32>
    tpu.vector_store %arg5[%c3, %c0_19, %c0_20], %21 {strides = array<i32>} : memref<6x128x16xf32, #tpu.memory_space<vmem>>, vector<1x128x16xf32>,
    %c2_21 = arith.constant 2 : index
    %c0_22 = arith.constant 0 : index
    %c0_23 = arith.constant 0 : index
    %22 = vector.load %arg2[%c2_21, %c0_22, %c0_23] : memref<3x16x16xf32, #tpu.memory_space<vmem>>, vector<1x16x16xf32>
    %23 = vector.shape_cast %22 : vector<1x16x16xf32> to vector<16x16xf32>
    %c0_24 = arith.constant 0 : index
    %c0_25 = arith.constant 0 : index
    %24 = vector.load %arg1[%c0_24, %c0_25] : memref<128x16xf32, #tpu.memory_space<vmem>>, vector<128x16xf32>
    %cst_26 = arith.constant dense<0.000000e+00> : vector<128x16xf32>
    %25 = tpu.matmul %24, %23, %cst_26 {dimension_numbers = #tpu.dot_dimension_numbers<[1], [0], [0], [1], [0, 0, 1, 1], [], []>} : vector<128x16xf32>, vector<16x16xf32>, vector<128x16xf32> -> vector<128x16xf32>
    %c4 = arith.constant 4 : index
    %c0_27 = arith.constant 0 : index
    %c0_28 = arith.constant 0 : index
    %26 = vector.load %arg5[%c4, %c0_27, %c0_28] : memref<6x128x16xf32, #tpu.memory_space<vmem>>, vector<1x128x16xf32>
    %27 = vector.shape_cast %26 : vector<1x128x16xf32> to vector<128x16xf32>
    %28 = vector.shape_cast %25 : vector<128x16xf32> to vector<1x128x16xf32>
    tpu.vector_store %arg5[%c4, %c0_27, %c0_28], %28 {strides = array<i32>} : memref<6x128x16xf32, #tpu.memory_space<vmem>>, vector<1x128x16xf32>,
    %cst_29 = arith.constant dense<0.000000e+00> : vector<128x16xf32>
    %29 = tpu.matmul %25, %23, %cst_29 {dimension_numbers = #tpu.dot_dimension_numbers<[1], [0], [0], [1], [0, 0, 1, 1], [], []>} : vector<128x16xf32>, vector<16x16xf32>, vector<128x16xf32> -> vector<128x16xf32>
    %c5 = arith.constant 5 : index
    %c0_30 = arith.constant 0 : index
    %c0_31 = arith.constant 0 : index
    %30 = vector.load %arg5[%c5, %c0_30, %c0_31] : memref<6x128x16xf32, #tpu.memory_space<vmem>>, vector<1x128x16xf32>
    %31 = vector.shape_cast %30 : vector<1x128x16xf32> to vector<128x16xf32>
    %32 = vector.shape_cast %29 : vector<128x16xf32> to vector<1x128x16xf32>
    tpu.vector_store %arg5[%c5, %c0_30, %c0_31], %32 {strides = array<i32>} : memref<6x128x16xf32, #tpu.memory_space<vmem>>, vector<1x128x16xf32>,
    %c0_32 = arith.constant 0 : index
    %c0_33 = arith.constant 0 : index
    %c0_34 = arith.constant 0 : index
    %33 = vector.load %arg3[%c0_32, %c0_33, %c0_34] : memref<7x16x16xf32, #tpu.memory_space<vmem>>, vector<1x16x16xf32>
    %34 = vector.shape_cast %33 : vector<1x16x16xf32> to vector<16x16xf32>
    %c1_35 = arith.constant 1 : index
    %c0_36 = arith.constant 0 : index
    %c0_37 = arith.constant 0 : index
    %35 = vector.load %arg3[%c1_35, %c0_36, %c0_37] : memref<7x16x16xf32, #tpu.memory_space<vmem>>, vector<1x16x16xf32>
    %36 = vector.shape_cast %35 : vector<1x16x16xf32> to vector<16x16xf32>
    %c2_38 = arith.constant 2 : index
    %c0_39 = arith.constant 0 : index
    %c0_40 = arith.constant 0 : index
    %37 = vector.load %arg3[%c2_38, %c0_39, %c0_40] : memref<7x16x16xf32, #tpu.memory_space<vmem>>, vector<1x16x16xf32>
    %38 = vector.shape_cast %37 : vector<1x16x16xf32> to vector<16x16xf32>
    %c3_41 = arith.constant 3 : index
    %c0_42 = arith.constant 0 : index
    %c0_43 = arith.constant 0 : index
    %39 = vector.load %arg3[%c3_41, %c0_42, %c0_43] : memref<7x16x16xf32, #tpu.memory_space<vmem>>, vector<1x16x16xf32>
    %40 = vector.shape_cast %39 : vector<1x16x16xf32> to vector<16x16xf32>
    %c4_44 = arith.constant 4 : index
    %c0_45 = arith.constant 0 : index
    %c0_46 = arith.constant 0 : index
    %41 = vector.load %arg3[%c4_44, %c0_45, %c0_46] : memref<7x16x16xf32, #tpu.memory_space<vmem>>, vector<1x16x16xf32>
    %42 = vector.shape_cast %41 : vector<1x16x16xf32> to vector<16x16xf32>
    %c5_47 = arith.constant 5 : index
    %c0_48 = arith.constant 0 : index
    %c0_49 = arith.constant 0 : index
    %43 = vector.load %arg3[%c5_47, %c0_48, %c0_49] : memref<7x16x16xf32, #tpu.memory_space<vmem>>, vector<1x16x16xf32>
    %44 = vector.shape_cast %43 : vector<1x16x16xf32> to vector<16x16xf32>
    %c6 = arith.constant 6 : index
    %c0_50 = arith.constant 0 : index
    %c0_51 = arith.constant 0 : index
    %45 = vector.load %arg3[%c6, %c0_50, %c0_51] : memref<7x16x16xf32, #tpu.memory_space<vmem>>, vector<1x16x16xf32>
    %46 = vector.shape_cast %45 : vector<1x16x16xf32> to vector<16x16xf32>
    %c0_i32 = arith.constant 0 : i32
    %c8_i32 = arith.constant 8 : i32
    %47 = arith.addi %c0_i32, %c8_i32 : i32
    %c1_i32 = arith.constant 1 : i32
    scf.for %arg6 = %c0_i32 to %47 step %c1_i32  : i32 {
      %c1_i32_53 = arith.constant 1 : i32
      %48 = arith.muli %arg6, %c1_i32_53 : i32
      %c0_i32_54 = arith.constant 0 : i32
      %49 = arith.addi %c0_i32_54, %48 : i32
      %c16_i32 = arith.constant 16 : i32
      %50 = arith.muli %49, %c16_i32 : i32
      %51 = tpu.assume_multiple %50, 16 : i32
      %c16_i32_55 = arith.constant 16 : i32
      %52 = arith.muli %49, %c16_i32_55 : i32
      %53 = tpu.assume_multiple %52, 16 : i32
      %54 = arith.index_cast %51 : i32 to index
      %c0_56 = arith.constant 0 : index
      %55 = vector.load %arg1[%54, %c0_56] : memref<128x16xf32, #tpu.memory_space<vmem>>, vector<16x16xf32>
      %cst_57 = arith.constant dense<0.000000e+00> : vector<16x16xf32>
      %56 = tpu.matmul %34, %55, %cst_57 {dimension_numbers = #tpu.dot_dimension_numbers<[1], [0], [0], [1], [0, 0, 1, 1], [], []>} : vector<16x16xf32>, vector<16x16xf32>, vector<16x16xf32> -> vector<16x16xf32>
      %c0_58 = arith.constant 0 : index
      %57 = arith.index_cast %51 : i32 to index
      %c0_59 = arith.constant 0 : index
      %58 = vector.load %arg5[%c0_58, %57, %c0_59] : memref<6x128x16xf32, #tpu.memory_space<vmem>>, vector<1x16x16xf32>
      %59 = vector.shape_cast %58 : vector<1x16x16xf32> to vector<16x16xf32>
      %cst_60 = arith.constant dense<0.000000e+00> : vector<16x16xf32>
      %60 = tpu.matmul %36, %59, %cst_60 {dimension_numbers = #tpu.dot_dimension_numbers<[1], [0], [0], [1], [0, 0, 1, 1], [], []>} : vector<16x16xf32>, vector<16x16xf32>, vector<16x16xf32> -> vector<16x16xf32>
      %61 = arith.addf %56, %60 : vector<16x16xf32>
      %c1_61 = arith.constant 1 : index
      %62 = arith.index_cast %51 : i32 to index
      %c0_62 = arith.constant 0 : index
      %63 = vector.load %arg5[%c1_61, %62, %c0_62] : memref<6x128x16xf32, #tpu.memory_space<vmem>>, vector<1x16x16xf32>
      %64 = vector.shape_cast %63 : vector<1x16x16xf32> to vector<16x16xf32>
      %cst_63 = arith.constant dense<0.000000e+00> : vector<16x16xf32>
      %65 = tpu.matmul %38, %64, %cst_63 {dimension_numbers = #tpu.dot_dimension_numbers<[1], [0], [0], [1], [0, 0, 1, 1], [], []>} : vector<16x16xf32>, vector<16x16xf32>, vector<16x16xf32> -> vector<16x16xf32>
      %66 = arith.addf %61, %65 : vector<16x16xf32>
      %c2_64 = arith.constant 2 : index
      %67 = arith.index_cast %51 : i32 to index
      %c0_65 = arith.constant 0 : index
      %68 = vector.load %arg5[%c2_64, %67, %c0_65] : memref<6x128x16xf32, #tpu.memory_space<vmem>>, vector<1x16x16xf32>
      %69 = vector.shape_cast %68 : vector<1x16x16xf32> to vector<16x16xf32>
      %cst_66 = arith.constant dense<0.000000e+00> : vector<16x16xf32>
      %70 = tpu.matmul %40, %69, %cst_66 {dimension_numbers = #tpu.dot_dimension_numbers<[1], [0], [0], [1], [0, 0, 1, 1], [], []>} : vector<16x16xf32>, vector<16x16xf32>, vector<16x16xf32> -> vector<16x16xf32>
      %71 = arith.addf %66, %70 : vector<16x16xf32>
      %c3_67 = arith.constant 3 : index
      %72 = arith.index_cast %51 : i32 to index
      %c0_68 = arith.constant 0 : index
      %73 = vector.load %arg5[%c3_67, %72, %c0_68] : memref<6x128x16xf32, #tpu.memory_space<vmem>>, vector<1x16x16xf32>
      %74 = vector.shape_cast %73 : vector<1x16x16xf32> to vector<16x16xf32>
      %cst_69 = arith.constant dense<0.000000e+00> : vector<16x16xf32>
      %75 = tpu.matmul %42, %74, %cst_69 {dimension_numbers = #tpu.dot_dimension_numbers<[1], [0], [0], [1], [0, 0, 1, 1], [], []>} : vector<16x16xf32>, vector<16x16xf32>, vector<16x16xf32> -> vector<16x16xf32>
      %76 = arith.addf %71, %75 : vector<16x16xf32>
      %c4_70 = arith.constant 4 : index
      %77 = arith.index_cast %51 : i32 to index
      %c0_71 = arith.constant 0 : index
      %78 = vector.load %arg5[%c4_70, %77, %c0_71] : memref<6x128x16xf32, #tpu.memory_space<vmem>>, vector<1x16x16xf32>
      %79 = vector.shape_cast %78 : vector<1x16x16xf32> to vector<16x16xf32>
      %cst_72 = arith.constant dense<0.000000e+00> : vector<16x16xf32>
      %80 = tpu.matmul %44, %79, %cst_72 {dimension_numbers = #tpu.dot_dimension_numbers<[1], [0], [0], [1], [0, 0, 1, 1], [], []>} : vector<16x16xf32>, vector<16x16xf32>, vector<16x16xf32> -> vector<16x16xf32>
      %81 = arith.addf %76, %80 : vector<16x16xf32>
      %c5_73 = arith.constant 5 : index
      %82 = arith.index_cast %51 : i32 to index
      %c0_74 = arith.constant 0 : index
      %83 = vector.load %arg5[%c5_73, %82, %c0_74] : memref<6x128x16xf32, #tpu.memory_space<vmem>>, vector<1x16x16xf32>
      %84 = vector.shape_cast %83 : vector<1x16x16xf32> to vector<16x16xf32>
      %cst_75 = arith.constant dense<0.000000e+00> : vector<16x16xf32>
      %85 = tpu.matmul %46, %84, %cst_75 {dimension_numbers = #tpu.dot_dimension_numbers<[1], [0], [0], [1], [0, 0, 1, 1], [], []>} : vector<16x16xf32>, vector<16x16xf32>, vector<16x16xf32> -> vector<16x16xf32>
      %86 = arith.addf %81, %85 : vector<16x16xf32>
      %87 = arith.index_cast %53 : i32 to index
      %c0_76 = arith.constant 0 : index
      %88 = vector.load %arg4[%87, %c0_76] : memref<128x16xf32, #tpu.memory_space<vmem>>, vector<16x16xf32>
      tpu.vector_store %arg4[%87, %c0_76], %86 {strides = array<i32>} : memref<128x16xf32, #tpu.memory_space<vmem>>, vector<16x16xf32>,
    }
    %c8_i32_52 = arith.constant 8 : i32
    return
  }
  func.func @transform_0(%arg0: i32) -> (i32, i32) {
    %c0_i32 = arith.constant 0 : i32
    %c0_i32_0 = arith.constant 0 : i32
    return %arg0, %c0_i32 : i32, i32
  }
  func.func @transform_1(%arg0: i32) -> (i32, i32, i32) {
    %c0_i32 = arith.constant 0 : i32
    %c0_i32_0 = arith.constant 0 : i32
    %c0_i32_1 = arith.constant 0 : i32
    %c0_i32_2 = arith.constant 0 : i32
    return %c0_i32, %c0_i32_0, %c0_i32_1 : i32, i32, i32
  }
  func.func @transform_2(%arg0: i32) -> (i32, i32, i32) {
    %c0_i32 = arith.constant 0 : i32
    %c0_i32_0 = arith.constant 0 : i32
    %c0_i32_1 = arith.constant 0 : i32
    %c0_i32_2 = arith.constant 0 : i32
    return %c0_i32, %c0_i32_0, %c0_i32_1 : i32, i32, i32
  }
  func.func @transform_3(%arg0: i32) -> (i32, i32) {
    %c0_i32 = arith.constant 0 : i32
    %c0_i32_0 = arith.constant 0 : i32
    return %arg0, %c0_i32 : i32, i32
  }
}

</mosaic_0001>

<llo_original>
// kernel: tpu_custom_call.1
$region0: #{tpu_custom_call.1}
  #allocation0 [shape = 'u32[]', space=smem, size = 0x4, offset = 0x4, fixed_abs, tag = 'smem constant byte address 0x4 - core index']
  #allocation1 [shape = 'u32[144,128]{1,0:T(1,128)}', space=vmem, size = 0x12000, scoped, tag = 'internal scratch']
  #allocation2 [shape = 'f32[6,128,16]{2,1,0:T(8,128)}', space=vmem, size = 0x60000, scoped, tag = 'scratch operand']
  %s0 = inlined_call_operand.vmem [shape: f32[256,16], index: 0, kind: input, shape index: {}]
  %s1 = inlined_call_operand.vmem [shape: f32[3,16,16], index: 1, kind: input, shape index: {}]
  %s2 = inlined_call_operand.vmem [shape: f32[7,16,16], index: 2, kind: input, shape index: {}]
  %s3 = inlined_call_operand.vmem [shape: f32[256,16], index: 3, kind: output, shape index: {}]
  %s4 = sld [smem:[#allocation0]]
  $region52: #{tpu_custom_call.1} parent=0
    _
  %s6 = ssub.s32 1, %s4
  %s7 = scalar_select 0, %s6, %s4
  loop: start=0, step=1, limit=4
  $region2: #{tpu_custom_call.1} parent=0 // loop_pre_header
    _
  $region3: #{tpu_custom_call.1} parent=0 // loop_header
    %s9 = sphi 0, %s13
    %p10 = scmp.ge.s32.totalorder %s9, 4
    %s19 = sphi 0, %s21
    %s22 = sphi 0, %s19
    %s23 = sphi 0, %s22
    %s39 = sphi 0, %s23
    %s43 = sphi 0, %s43
    %s45 = sphi 0, %s43
    %s46 = sphi 0, %s45
    %s60 = sphi 0, %s46
    %s64 = sphi 0, %s64
    %s66 = sphi 0, %s64
    %s67 = sphi 0, %s66
    %s81 = sphi 0, %s67
    %s87 = sphi 0, %s89
    %s90 = sphi 0, %s87
    %s91 = sphi 0, %s90
    %s107 = sphi 0, %s91
  $region4: #{tpu_custom_call.1} parent=0 // loop_header_branch
    %12 = sbr.rel (%p10) target = $region8
  $region5: #{tpu_custom_call.1} parent=0 // loop_body
    %s14 = ssub.s32 %s9, 1
    %s15 = ssub.s32 %s9, 2
    %s16 = sadd.s32 %s9, 1
    %s17 = ssub.s32 %s9, %s16
    %p18 = scmp.eq.s32.totalorder %s17, 0
    %s20 = sadd.s32 %s19, 1
    %s21 = scalar_select %p18, %s19, %s20
    %p24 = pneg %p18
    %p25 = scmp.eq.s32.totalorder %s9, 1
    %p26 = por %p24, %p25
    %p27 = scmp.ne.s32.totalorder %s19, %s22
    %p28 = scmp.eq.s32.totalorder %s9, 0
    %p29 = por %p27, %p28
    %p30 = scmp.ne.s32.totalorder %s19, %s22
    %p31 = scmp.eq.s32.totalorder %s14, 1
    %p32 = por %p30, %p31
    %p33 = scmp.ne.s32.totalorder %s22, %s23
    %p34 = scmp.eq.s32.totalorder %s14, 0
    %p35 = por %p33, %p34
    %p36 = scmp.ne.s32.totalorder %s22, %s23
    %p37 = scmp.eq.s32.totalorder %s15, 1
    %p38 = por %p36, %p37
    %p40 = scmp.ne.s32.totalorder %s23, %s39
    %p41 = scmp.eq.s32.totalorder %s15, 0
    %p42 = por %p40, %p41
    %s44 = sadd.s32 %s43, 1
    %p47 = scmp.eq.s32.totalorder %s9, 1
    %p48 = scmp.ne.s32.totalorder %s43, %s45
    %p49 = scmp.eq.s32.totalorder %s9, 0
    %p50 = por %p48, %p49
    %p51 = scmp.ne.s32.totalorder %s43, %s45
    %p52 = scmp.eq.s32.totalorder %s14, 1
    %p53 = por %p51, %p52
    %p54 = scmp.ne.s32.totalorder %s45, %s46
    %p55 = scmp.eq.s32.totalorder %s14, 0
    %p56 = por %p54, %p55
    %p57 = scmp.ne.s32.totalorder %s45, %s46
    %p58 = scmp.eq.s32.totalorder %s15, 1
    %p59 = por %p57, %p58
    %p61 = scmp.ne.s32.totalorder %s46, %s60
    %p62 = scmp.eq.s32.totalorder %s15, 0
    %p63 = por %p61, %p62
    %s65 = sadd.s32 %s64, 1
    %p68 = scmp.eq.s32.totalorder %s9, 1
    %p69 = scmp.ne.s32.totalorder %s64, %s66
    %p70 = scmp.eq.s32.totalorder %s9, 0
    %p71 = por %p69, %p70
    %p72 = scmp.ne.s32.totalorder %s64, %s66
    %p73 = scmp.eq.s32.totalorder %s14, 1
    %p74 = por %p72, %p73
    %p75 = scmp.ne.s32.totalorder %s66, %s67
    %p76 = scmp.eq.s32.totalorder %s14, 0
    %p77 = por %p75, %p76
    %p78 = scmp.ne.s32.totalorder %s66, %s67
    %p79 = scmp.eq.s32.totalorder %s15, 1
    %p80 = por %p78, %p79
    %p82 = scmp.ne.s32.totalorder %s67, %s81
    %p83 = scmp.eq.s32.totalorder %s15, 0
    %p84 = por %p82, %p83
    %s85 = ssub.s32 %s9, %s16
    %p86 = scmp.eq.s32.totalorder %s85, 0
    %s88 = sadd.s32 %s87, 1
    %s89 = scalar_select %p86, %s87, %s88
    %p92 = pneg %p86
    %p93 = scmp.eq.s32.totalorder %s9, 1
    %p94 = por %p92, %p93
    %p95 = scmp.ne.s32.totalorder %s87, %s90
    %p96 = scmp.eq.s32.totalorder %s9, 0
    %p97 = por %p95, %p96
    %p98 = scmp.ne.s32.totalorder %s87, %s90
    %p99 = scmp.eq.s32.totalorder %s14, 1
    %p100 = por %p98, %p99
    %p101 = scmp.ne.s32.totalorder %s90, %s91
    %p102 = scmp.eq.s32.totalorder %s14, 0
    %p103 = por %p101, %p102
    %p104 = scmp.ne.s32.totalorder %s90, %s91
    %p105 = scmp.eq.s32.totalorder %s15, 1
    %p106 = por %p104, %p105
    %p108 = scmp.ne.s32.totalorder %s91, %s107
    %p109 = scmp.eq.s32.totalorder %s15, 0
    %p110 = por %p108, %p109
    %p111 = scmp.le.s32.totalorder 1, %s9
    %p112 = scmp.lt.s32.totalorder %s9, 3
    %p113 = pnand %p111, %p112
    %p114 = pneg %p113
    // Predicated region
    $region9: #{tpu_custom_call.1} parent=5 // pred_check
      _
    $region10: #{tpu_custom_call.1} parent=5 // pred_check_branch
      %116 = sbr.rel (%p113) target = $region12
    $region11: #{tpu_custom_call.1} parent=5 // pred_region
      %s117 = ssub.s32 %s9, 1
      // Predicated region
      $region13: #{tpu_custom_call.1} parent=11 // pred_check
        %p118 = pneg %p56
      $region14: #{tpu_custom_call.1} parent=11 // pred_check_branch
        %120 = sbr.rel (%p118) target = $region16
      $region15: #{tpu_custom_call.1} parent=11 // pred_region
        _
      $region16: #{tpu_custom_call.1} parent=11 // pred_fallthru
        _
      // Predicated region
      $region17: #{tpu_custom_call.1} parent=11 // pred_check
        %p121 = pneg %p77
      $region18: #{tpu_custom_call.1} parent=11 // pred_check_branch
        %123 = sbr.rel (%p121) target = $region20
      $region19: #{tpu_custom_call.1} parent=11 // pred_region
        _
      $region20: #{tpu_custom_call.1} parent=11 // pred_fallthru
        _
    $region12: #{tpu_custom_call.1} parent=5 // pred_fallthru
      _
    %p124 = scmp.lt.s32.totalorder %s9, 2
    // Predicated region
    $region21: #{tpu_custom_call.1} parent=5 // pred_check
      %p125 = pneg %p124
    $region22: #{tpu_custom_call.1} parent=5 // pred_check_branch
      %127 = sbr.rel (%p125) target = $region24
    $region23: #{tpu_custom_call.1} parent=5 // pred_region
      // Predicated region
      $region25: #{tpu_custom_call.1} parent=23 // pred_check
        %p128 = pneg %p29
      $region26: #{tpu_custom_call.1} parent=23 // pred_check_branch
        %130 = sbr.rel (%p128) target = $region28
      $region27: #{tpu_custom_call.1} parent=23 // pred_region
        %s131 = smul.u32 16, %s9
        %p132 = scmp.lt.s32.totalorder %s131, 31
        %s133 = scalar_select %p132, %s131, 31
        %s134 = smul.addr %s133, 8
        %s135 = scalar_lea.vmem %s0, %s134
        %s136 = smul.u32 16, %s9
      $region28: #{tpu_custom_call.1} parent=23 // pred_fallthru
        _
    $region24: #{tpu_custom_call.1} parent=5 // pred_fallthru
      _
    %p137 = scmp.le.s32.totalorder 1, %s9
    %p138 = scmp.lt.s32.totalorder %s9, 3
    %p139 = pnand %p137, %p138
    %p140 = pneg %p139
    // Predicated region
    $region29: #{tpu_custom_call.1} parent=5 // pred_check
      _
    $region30: #{tpu_custom_call.1} parent=5 // pred_check_branch
      %142 = sbr.rel (%p139) target = $region32
    $region31: #{tpu_custom_call.1} parent=5 // pred_region
      %s143 = ssub.s32 %s9, 1
      %s144 = smul.u32 16, %s14
      %p145 = scmp.lt.s32.totalorder %s144, 31
      %s146 = scalar_select %p145, %s144, 31
      %s147 = smul.addr %s146, 8
      %s148 = scalar_lea.vmem %s0, %s147
      %p149 = pneg %p35
      %p150 = pneg %p32
      %p151 = pneg %p56
      %p152 = pneg %p53
      %p153 = pneg %p77
      %p154 = pneg %p74
      %p155 = pneg %p103
      %p156 = pneg %p100
      %s157 = smul.u32 16, %s14
      %p158 = scmp.lt.s32.totalorder %s157, 31
      %s159 = scalar_select %p158, %s157, 31
      %s160 = smul.addr %s159, 8
      %s161 = scalar_lea.vmem %s3, %s160
      %s162 = smul.u32 16, %s14
      %p163 = scmp.lt.s32.totalorder %s162, 31
      %s164 = scalar_select %p163, %s162, 31
      %s165 = smul.addr %s164, 8
      %s166 = scalar_lea.vmem %s0, %s165
      %s167 = smul.u32 16, %s14
      %s168 = smul.u32 16, %s14
      %p169 = scmp.lt.s32.totalorder %s168, 31
      %s170 = scalar_select %p169, %s168, 31
      %s171 = smul.addr %s170, 8
      %s172 = scalar_lea.vmem %s3, %s171
      %s173 = smul.u32 16, %s14
      %v174 = vld [vmem:[%s1] sm:$0xff]
      %v175 = vld [vmem:[%s1 + $0x8] sm:$0xff]
      %v176 = vld [vmem:[%s166] sm:$0xff]
      %v177 = vld [vmem:[%s166 + $0x8] sm:$0xff]
      %v178 = vld [vmem:[%s166 + $0x10] sm:$0xff]
      %v179 = vld [vmem:[%s166 + $0x18] sm:$0xff]
      %v180 = vld [vmem:[%s166 + $0x20] sm:$0xff]
      %v181 = vld [vmem:[%s166 + $0x28] sm:$0xff]
      %v182 = vld [vmem:[%s166 + $0x30] sm:$0xff]
      %v183 = vld [vmem:[%s166 + $0x38] sm:$0xff]
      %v184 = vld [vmem:[%s166 + $0x40] sm:$0xff]
      %v185 = vld [vmem:[%s166 + $0x48] sm:$0xff]
      %v186 = vld [vmem:[%s166 + $0x50] sm:$0xff]
      %v187 = vld [vmem:[%s166 + $0x58] sm:$0xff]
      %v188 = vld [vmem:[%s166 + $0x60] sm:$0xff]
      %v189 = vld [vmem:[%s166 + $0x68] sm:$0xff]
      %v190 = vld [vmem:[%s166 + $0x70] sm:$0xff]
      %v191 = vld [vmem:[%s166 + $0x78] sm:$0xff]
      %vm192 = vcmask 130048
      %v194 = vsel %vm192, %v176, 0
      %v197 = vsel %vm192, %v177, 0
      %v200 = vsel %vm192, %v178, 0
      %v203 = vsel %vm192, %v179, 0
      %v206 = vsel %vm192, %v180, 0
      %v209 = vsel %vm192, %v181, 0
      %v212 = vsel %vm192, %v182, 0
      %v215 = vsel %vm192, %v183, 0
      %v218 = vsel %vm192, %v184, 0
      %v221 = vsel %vm192, %v185, 0
      %v224 = vsel %vm192, %v186, 0
      %v227 = vsel %vm192, %v187, 0
      %v230 = vsel %vm192, %v188, 0
      %v233 = vsel %vm192, %v189, 0
      %v236 = vsel %vm192, %v190, 0
      %v239 = vsel %vm192, %v191, 0
      %241 = vmatprep.subr.mxu0 0.0
      %242 = vmatpush1.msra.mxu0 %v174
      %243 = vmatprep.subr.mxu0 0.0
      %244 = vmatpush1.msra.mxu0 %v175
      %245 = vmatprep.subr.mxu0 0.0
      %246 = vmatpush1.msra.mxu0 0.0
      %247 = vmatprep.subr.mxu0 0.0
      %248 = vmatpush1.msra.mxu0 0.0
      %249 = vmatprep.subr.mxu0 0.0
      %250 = vmatpush1.msra.mxu0 0.0
      %251 = vmatprep.subr.mxu0 0.0
      %252 = vmatpush1.msra.mxu0 0.0
      %253 = vmatprep.subr.mxu0 0.0
      %254 = vmatpush1.msra.mxu0 0.0
      %255 = vmatprep.subr.mxu0 0.0
      %256 = vmatpush1.msra.mxu0 0.0
      %257 = vmatprep.subr.mxu0 0.0
      %258 = vmatpush1.msra.mxu0 0.0
      %259 = vmatprep.subr.mxu0 0.0
      %260 = vmatpush1.msra.mxu0 0.0
      %261 = vmatprep.subr.mxu0 0.0
      %262 = vmatpush1.msra.mxu0 0.0
      %263 = vmatprep.subr.mxu0 0.0
      %264 = vmatpush1.msra.mxu0 0.0
      %265 = vmatprep.subr.mxu0 0.0
      %266 = vmatpush1.msra.mxu0 0.0
      %267 = vmatprep.subr.mxu0 0.0
      %268 = vmatpush1.msra.mxu0 0.0
      %269 = vmatprep.subr.mxu0 0.0
      %270 = vmatpush1.msra.mxu0 0.0
      %271 = vmatprep.subr.mxu0 0.0
      %272 = vmatpush1.msra.mxu0 0.0
      %273 = vmatprep.subr.mxu0 0.0
      %274 = vmatpush1.msra.mxu0 0.0
      %275 = vmatprep.subr.mxu0 0.0
      %276 = vmatpush1.msra.mxu0 0.0
      %277 = vmatprep.subr.mxu0 0.0
      %278 = vmatpush1.msra.mxu0 0.0
      %279 = vmatprep.subr.mxu0 0.0
      %280 = vmatpush1.msra.mxu0 0.0
      %281 = vmatprep.subr.mxu0 0.0
      %282 = vmatpush1.msra.mxu0 0.0
      %283 = vmatprep.subr.mxu0 0.0
      %284 = vmatpush1.msra.mxu0 0.0
      %285 = vmatprep.subr.mxu0 0.0
      %286 = vmatpush1.msra.mxu0 0.0
      %287 = vmatprep.subr.mxu0 0.0
      %288 = vmatpush1.msra.mxu0 0.0
      %289 = vmatprep.subr.mxu0 0.0
      %290 = vmatpush1.msra.mxu0 0.0
      %291 = vmatprep.subr.mxu0 0.0
      %292 = vmatpush1.msra.mxu0 0.0
      %293 = vmatprep.subr.mxu0 0.0
      %294 = vmatpush1.msra.mxu0 0.0
      %295 = vmatprep.subr.mxu0 0.0
      %296 = vmatpush1.msra.mxu0 0.0
      %297 = vmatprep.subr.mxu0 0.0
      %298 = vmatpush1.msra.mxu0 0.0
      %299 = vmatprep.subr.mxu0 0.0
      %300 = vmatpush1.msra.mxu0 0.0
      %301 = vmatprep.subr.mxu0 0.0
      %302 = vmatpush1.msra.mxu0 0.0
      %303 = vmatprep.subr.mxu0 0.0
      %304 = vmatpush1.msra.mxu0 0.0
      %305 = vmatprep.mubr.f32.mxu0 0.0
      %306 = vmatmul.mubr.f32.gmra.mrb[0].mxu0 %v194
      %v307 = vpop.f32.mrb[0].mxu0
      %v308 = vadd.f32 0.0, %v307
      %v309 = vpop.f32.mrb[0].mxu0
      %310 = vmatprep.mubr.f32.mxu0 0.0
      %311 = vmatmul.mubr.f32.gmra.mrb[0].mxu0 %v197
      %v312 = vpop.f32.mrb[0].mxu0
      %v313 = vadd.f32 0.0, %v312
      %v314 = vpop.f32.mrb[0].mxu0
      %315 = vmatprep.mubr.f32.mxu0 0.0
      %316 = vmatmul.mubr.f32.gmra.mrb[0].mxu0 %v200
      %v317 = vpop.f32.mrb[0].mxu0
      %v318 = vadd.f32 0.0, %v317
      %v319 = vpop.f32.mrb[0].mxu0
      %320 = vmatprep.mubr.f32.mxu0 0.0
      %321 = vmatmul.mubr.f32.gmra.mrb[0].mxu0 %v203
      %v322 = vpop.f32.mrb[0].mxu0
      %v323 = vadd.f32 0.0, %v322
      %v324 = vpop.f32.mrb[0].mxu0
      %325 = vmatprep.mubr.f32.mxu0 0.0
      %326 = vmatmul.mubr.f32.gmra.mrb[0].mxu0 %v206
      %v327 = vpop.f32.mrb[0].mxu0
      %v328 = vadd.f32 0.0, %v327
      %v329 = vpop.f32.mrb[0].mxu0
      %330 = vmatprep.mubr.f32.mxu0 0.0
      %331 = vmatmul.mubr.f32.gmra.mrb[0].mxu0 %v209
      %v332 = vpop.f32.mrb[0].mxu0
      %v333 = vadd.f32 0.0, %v332
      %v334 = vpop.f32.mrb[0].mxu0
      %335 = vmatprep.mubr.f32.mxu0 0.0
      %336 = vmatmul.mubr.f32.gmra.mrb[0].mxu0 %v212
      %v337 = vpop.f32.mrb[0].mxu0
      %v338 = vadd.f32 0.0, %v337
      %v339 = vpop.f32.mrb[0].mxu0
      %340 = vmatprep.mubr.f32.mxu0 0.0
      %341 = vmatmul.mubr.f32.gmra.mrb[0].mxu0 %v215
      %v342 = vpop.f32.mrb[0].mxu0
      %v343 = vadd.f32 0.0, %v342
      %v344 = vpop.f32.mrb[0].mxu0
      %345 = vmatprep.mubr.f32.mxu0 0.0
      %346 = vmatmul.mubr.f32.gmra.mrb[0].mxu0 %v218
      %v347 = vpop.f32.mrb[0].mxu0
      %v348 = vadd.f32 0.0, %v347
      %v349 = vpop.f32.mrb[0].mxu0
      %350 = vmatprep.mubr.f32.mxu0 0.0
      %351 = vmatmul.mubr.f32.gmra.mrb[0].mxu0 %v221
      %v352 = vpop.f32.mrb[0].mxu0
      %v353 = vadd.f32 0.0, %v352
      %v354 = vpop.f32.mrb[0].mxu0
      %355 = vmatprep.mubr.f32.mxu0 0.0
      %356 = vmatmul.mubr.f32.gmra.mrb[0].mxu0 %v224
      %v357 = vpop.f32.mrb[0].mxu0
      %v358 = vadd.f32 0.0, %v357
      %v359 = vpop.f32.mrb[0].mxu0
      %360 = vmatprep.mubr.f32.mxu0 0.0
      %361 = vmatmul.mubr.f32.gmra.mrb[0].mxu0 %v227
      %v362 = vpop.f32.mrb[0].mxu0
      %v363 = vadd.f32 0.0, %v362
      %v364 = vpop.f32.mrb[0].mxu0
      %365 = vmatprep.mubr.f32.mxu0 0.0
      %366 = vmatmul.mubr.f32.gmra.mrb[0].mxu0 %v230
      %v367 = vpop.f32.mrb[0].mxu0
      %v368 = vadd.f32 0.0, %v367
      %v369 = vpop.f32.mrb[0].mxu0
      %370 = vmatprep.mubr.f32.mxu0 0.0
      %371 = vmatmul.mubr.f32.gmra.mrb[0].mxu0 %v233
      %v372 = vpop.f32.mrb[0].mxu0
      %v373 = vadd.f32 0.0, %v372
      %v374 = vpop.f32.mrb[0].mxu0
      %375 = vmatprep.mubr.f32.mxu0 0.0
      %376 = vmatmul.mubr.f32.gmra.mrb[0].mxu0 %v236
      %v377 = vpop.f32.mrb[0].mxu0
      %v378 = vadd.f32 0.0, %v377
      %v379 = vpop.f32.mrb[0].mxu0
      %380 = vmatprep.mubr.f32.mxu0 0.0
      %381 = vmatmul.mubr.f32.gmra.mrb[0].mxu0 %v239
      %v382 = vpop.f32.mrb[0].mxu0
      %v383 = vadd.f32 0.0, %v382
      %v384 = vpop.f32.mrb[0].mxu0
      %385 = vdwg.mxu0
      %386 = vst.msk [vmem:[#allocation2] sm:$0xff] %vm192, %v308
      %387 = vst.msk [vmem:[#allocation2 + $0x8] sm:$0xff] %vm192, %v313
      %388 = vst.msk [vmem:[#allocation2 + $0x10] sm:$0xff] %vm192, %v318
      %389 = vst.msk [vmem:[#allocation2 + $0x18] sm:$0xff] %vm192, %v323
      %390 = vst.msk [vmem:[#allocation2 + $0x20] sm:$0xff] %vm192, %v328
      %391 = vst.msk [vmem:[#allocation2 + $0x28] sm:$0xff] %vm192, %v333
      %392 = vst.msk [vmem:[#allocation2 + $0x30] sm:$0xff] %vm192, %v338
      %393 = vst.msk [vmem:[#allocation2 + $0x38] sm:$0xff] %vm192, %v343
      %394 = vst.msk [vmem:[#allocation2 + $0x40] sm:$0xff] %vm192, %v348
      %395 = vst.msk [vmem:[#allocation2 + $0x48] sm:$0xff] %vm192, %v353
      %396 = vst.msk [vmem:[#allocation2 + $0x50] sm:$0xff] %vm192, %v358
      %397 = vst.msk [vmem:[#allocation2 + $0x58] sm:$0xff] %vm192, %v363
      %398 = vst.msk [vmem:[#allocation2 + $0x60] sm:$0xff] %vm192, %v368
      %399 = vst.msk [vmem:[#allocation2 + $0x68] sm:$0xff] %vm192, %v373
      %400 = vst.msk [vmem:[#allocation2 + $0x70] sm:$0xff] %vm192, %v378
      %401 = vst.msk [vmem:[#allocation2 + $0x78] sm:$0xff] %vm192, %v383
      %v403 = vsel %vm192, %v308, 0
      %v406 = vsel %vm192, %v313, 0
      %v409 = vsel %vm192, %v318, 0
      %v412 = vsel %vm192, %v323, 0
      %v415 = vsel %vm192, %v328, 0
      %v418 = vsel %vm192, %v333, 0
      %v421 = vsel %vm192, %v338, 0
      %v424 = vsel %vm192, %v343, 0
      %v427 = vsel %vm192, %v348, 0
      %v430 = vsel %vm192, %v353, 0
      %v433 = vsel %vm192, %v358, 0
      %v436 = vsel %vm192, %v363, 0
      %v439 = vsel %vm192, %v368, 0
      %v442 = vsel %vm192, %v373, 0
      %v445 = vsel %vm192, %v378, 0
      %v448 = vsel %vm192, %v383, 0
      %450 = vmatprep.subr.mxu0 0.0
      %451 = vmatpush1.msra.mxu0 %v174
      %452 = vmatprep.subr.mxu0 0.0
      %453 = vmatpush1.msra.mxu0 %v175
      %454 = vmatprep.subr.mxu0 0.0
      %455 = vmatpush1.msra.mxu0 0.0
      %456 = vmatprep.subr.mxu0 0.0
      %457 = vmatpush1.msra.mxu0 0.0
      %458 = vmatprep.subr.mxu0 0.0
      %459 = vmatpush1.msra.mxu0 0.0
      %460 = vmatprep.subr.mxu0 0.0
      %461 = vmatpush1.msra.mxu0 0.0
      %462 = vmatprep.subr.mxu0 0.0
      %463 = vmatpush1.msra.mxu0 0.0
      %464 = vmatprep.subr.mxu0 0.0
      %465 = vmatpush1.msra.mxu0 0.0
      %466 = vmatprep.subr.mxu0 0.0
      %467 = vmatpush1.msra.mxu0 0.0
      %468 = vmatprep.subr.mxu0 0.0
      %469 = vmatpush1.msra.mxu0 0.0
      %470 = vmatprep.subr.mxu0 0.0
      %471 = vmatpush1.msra.mxu0 0.0
      %472 = vmatprep.subr.mxu0 0.0
      %473 = vmatpush1.msra.mxu0 0.0
      %474 = vmatprep.subr.mxu0 0.0
      %475 = vmatpush1.msra.mxu0 0.0
      %476 = vmatprep.subr.mxu0 0.0
      %477 = vmatpush1.msra.mxu0 0.0
      %478 = vmatprep.subr.mxu0 0.0
      %479 = vmatpush1.msra.mxu0 0.0
      %480 = vmatprep.subr.mxu0 0.0
      %481 = vmatpush1.msra.mxu0 0.0
      %482 = vmatprep.subr.mxu0 0.0
      %483 = vmatpush1.msra.mxu0 0.0
      %484 = vmatprep.subr.mxu0 0.0
      %485 = vmatpush1.msra.mxu0 0.0
      %486 = vmatprep.subr.mxu0 0.0
      %487 = vmatpush1.msra.mxu0 0.0
      %488 = vmatprep.subr.mxu0 0.0
      %489 = vmatpush1.msra.mxu0 0.0
      %490 = vmatprep.subr.mxu0 0.0
      %491 = vmatpush1.msra.mxu0 0.0
      %492 = vmatprep.subr.mxu0 0.0
      %493 = vmatpush1.msra.mxu0 0.0
      %494 = vmatprep.subr.mxu0 0.0
      %495 = vmatpush1.msra.mxu0 0.0
      %496 = vmatprep.subr.mxu0 0.0
      %497 = vmatpush1.msra.mxu0 0.0
      %498 = vmatprep.subr.mxu0 0.0
      %499 = vmatpush1.msra.mxu0 0.0
      %500 = vmatprep.subr.mxu0 0.0
      %501 = vmatpush1.msra.mxu0 0.0
      %502 = vmatprep.subr.mxu0 0.0
      %503 = vmatpush1.msra.mxu0 0.0
      %504 = vmatprep.subr.mxu0 0.0
      %505 = vmatpush1.msra.mxu0 0.0
      %506 = vmatprep.subr.mxu0 0.0
      %507 = vmatpush1.msra.mxu0 0.0
      %508 = vmatprep.subr.mxu0 0.0
      %509 = vmatpush1.msra.mxu0 0.0
      %510 = vmatprep.subr.mxu0 0.0
      %511 = vmatpush1.msra.mxu0 0.0
      %512 = vmatprep.subr.mxu0 0.0
      %513 = vmatpush1.msra.mxu0 0.0
      %514 = vmatprep.mubr.f32.mxu0 0.0
      %515 = vmatmul.mubr.f32.gmra.mrb[0].mxu0 %v403
      %v516 = vpop.f32.mrb[0].mxu0
      %v517 = vadd.f32 0.0, %v516
      %v518 = vpop.f32.mrb[0].mxu0
      %519 = vmatprep.mubr.f32.mxu0 0.0
      %520 = vmatmul.mubr.f32.gmra.mrb[0].mxu0 %v406
      %v521 = vpop.f32.mrb[0].mxu0
      %v522 = vadd.f32 0.0, %v521
      %v523 = vpop.f32.mrb[0].mxu0
      %524 = vmatprep.mubr.f32.mxu0 0.0
      %525 = vmatmul.mubr.f32.gmra.mrb[0].mxu0 %v409
      %v526 = vpop.f32.mrb[0].mxu0
      %v527 = vadd.f32 0.0, %v526
      %v528 = vpop.f32.mrb[0].mxu0
      %529 = vmatprep.mubr.f32.mxu0 0.0
      %530 = vmatmul.mubr.f32.gmra.mrb[0].mxu0 %v412
      %v531 = vpop.f32.mrb[0].mxu0
      %v532 = vadd.f32 0.0, %v531
      %v533 = vpop.f32.mrb[0].mxu0
      %534 = vmatprep.mubr.f32.mxu0 0.0
      %535 = vmatmul.mubr.f32.gmra.mrb[0].mxu0 %v415
      %v536 = vpop.f32.mrb[0].mxu0
      %v537 = vadd.f32 0.0, %v536
      %v538 = vpop.f32.mrb[0].mxu0
      %539 = vmatprep.mubr.f32.mxu0 0.0
      %540 = vmatmul.mubr.f32.gmra.mrb[0].mxu0 %v418
      %v541 = vpop.f32.mrb[0].mxu0
      %v542 = vadd.f32 0.0, %v541
      %v543 = vpop.f32.mrb[0].mxu0
      %544 = vmatprep.mubr.f32.mxu0 0.0
      %545 = vmatmul.mubr.f32.gmra.mrb[0].mxu0 %v421
      %v546 = vpop.f32.mrb[0].mxu0
      %v547 = vadd.f32 0.0, %v546
      %v548 = vpop.f32.mrb[0].mxu0
      %549 = vmatprep.mubr.f32.mxu0 0.0
      %550 = vmatmul.mubr.f32.gmra.mrb[0].mxu0 %v424
      %v551 = vpop.f32.mrb[0].mxu0
      %v552 = vadd.f32 0.0, %v551
      %v553 = vpop.f32.mrb[0].mxu0
      %554 = vmatprep.mubr.f32.mxu0 0.0
      %555 = vmatmul.mubr.f32.gmra.mrb[0].mxu0 %v427
      %v556 = vpop.f32.mrb[0].mxu0
      %v557 = vadd.f32 0.0, %v556
      %v558 = vpop.f32.mrb[0].mxu0
      %559 = vmatprep.mubr.f32.mxu0 0.0
      %560 = vmatmul.mubr.f32.gmra.mrb[0].mxu0 %v430
      %v561 = vpop.f32.mrb[0].mxu0
      %v562 = vadd.f32 0.0, %v561
      %v563 = vpop.f32.mrb[0].mxu0
      %564 = vmatprep.mubr.f32.mxu0 0.0
      %565 = vmatmul.mubr.f32.gmra.mrb[0].mxu0 %v433
      %v566 = vpop.f32.mrb[0].mxu0
      %v567 = vadd.f32 0.0, %v566
      %v568 = vpop.f32.mrb[0].mxu0
      %569 = vmatprep.mubr.f32.mxu0 0.0
      %570 = vmatmul.mubr.f32.gmra.mrb[0].mxu0 %v436
      %v571 = vpop.f32.mrb[0].mxu0
      %v572 = vadd.f32 0.0, %v571
      %v573 = vpop.f32.mrb[0].mxu0
      %574 = vmatprep.mubr.f32.mxu0 0.0
      %575 = vmatmul.mubr.f32.gmra.mrb[0].mxu0 %v439
      %v576 = vpop.f32.mrb[0].mxu0
      %v577 = vadd.f32 0.0, %v576
      %v578 = vpop.f32.mrb[0].mxu0
      %579 = vmatprep.mubr.f32.mxu0 0.0
      %580 = vmatmul.mubr.f32.gmra.mrb[0].mxu0 %v442
      %v581 = vpop.f32.mrb[0].mxu0
      %v582 = vadd.f32 0.0, %v581
      %v583 = vpop.f32.mrb[0].mxu0
      %584 = vmatprep.mubr.f32.mxu0 0.0
      %585 = vmatmul.mubr.f32.gmra.mrb[0].mxu0 %v445
      %v586 = vpop.f32.mrb[0].mxu0
      %v587 = vadd.f32 0.0, %v586
      %v588 = vpop.f32.mrb[0].mxu0
      %589 = vmatprep.mubr.f32.mxu0 0.0
      %590 = vmatmul.mubr.f32.gmra.mrb[0].mxu0 %v448
      %v591 = vpop.f32.mrb[0].mxu0
      %v592 = vadd.f32 0.0, %v591
      %v593 = vpop.f32.mrb[0].mxu0
      %594 = vdwg.mxu0
      %s595 = scalar_lea.vmem [#allocation2], 128
      %596 = vst.msk [vmem:[%s595] sm:$0xff] %vm192, %v517
      %597 = vst.msk [vmem:[%s595 + $0x8] sm:$0xff] %vm192, %v522
      %598 = vst.msk [vmem:[%s595 + $0x10] sm:$0xff] %vm192, %v527
      %599 = vst.msk [vmem:[%s595 + $0x18] sm:$0xff] %vm192, %v532
      %600 = vst.msk [vmem:[%s595 + $0x20] sm:$0xff] %vm192, %v537
      %601 = vst.msk [vmem:[%s595 + $0x28] sm:$0xff] %vm192, %v542
      %602 = vst.msk [vmem:[%s595 + $0x30] sm:$0xff] %vm192, %v547
      %603 = vst.msk [vmem:[%s595 + $0x38] sm:$0xff] %vm192, %v552
      %604 = vst.msk [vmem:[%s595 + $0x40] sm:$0xff] %vm192, %v557
      %605 = vst.msk [vmem:[%s595 + $0x48] sm:$0xff] %vm192, %v562
      %606 = vst.msk [vmem:[%s595 + $0x50] sm:$0xff] %vm192, %v567
      %607 = vst.msk [vmem:[%s595 + $0x58] sm:$0xff] %vm192, %v572
      %608 = vst.msk [vmem:[%s595 + $0x60] sm:$0xff] %vm192, %v577
      %609 = vst.msk [vmem:[%s595 + $0x68] sm:$0xff] %vm192, %v582
      %610 = vst.msk [vmem:[%s595 + $0x70] sm:$0xff] %vm192, %v587
      %611 = vst.msk [vmem:[%s595 + $0x78] sm:$0xff] %vm192, %v592
      %s612 = scalar_lea.vmem %s1, 16
      %v613 = vld [vmem:[%s612] sm:$0xff]
      %v614 = vld [vmem:[%s612 + $0x8] sm:$0xff]
      %v615 = vld [vmem:[%s166] sm:$0xff]
      %v616 = vld [vmem:[%s166 + $0x8] sm:$0xff]
      %v617 = vld [vmem:[%s166 + $0x10] sm:$0xff]
      %v618 = vld [vmem:[%s166 + $0x18] sm:$0xff]
      %v619 = vld [vmem:[%s166 + $0x20] sm:$0xff]
      %v620 = vld [vmem:[%s166 + $0x28] sm:$0xff]
      %v621 = vld [vmem:[%s166 + $0x30] sm:$0xff]
      %v622 = vld [vmem:[%s166 + $0x38] sm:$0xff]
      %v623 = vld [vmem:[%s166 + $0x40] sm:$0xff]
      %v624 = vld [vmem:[%s166 + $0x48] sm:$0xff]
      %v625 = vld [vmem:[%s166 + $0x50] sm:$0xff]
      %v626 = vld [vmem:[%s166 + $0x58] sm:$0xff]
      %v627 = vld [vmem:[%s166 + $0x60] sm:$0xff]
      %v628 = vld [vmem:[%s166 + $0x68] sm:$0xff]
      %v629 = vld [vmem:[%s166 + $0x70] sm:$0xff]
      %v630 = vld [vmem:[%s166 + $0x78] sm:$0xff]
      %v632 = vsel %vm192, %v615, 0
      %v635 = vsel %vm192, %v616, 0
      %v638 = vsel %vm192, %v617, 0
      %v641 = vsel %vm192, %v618, 0
      %v644 = vsel %vm192, %v619, 0
      %v647 = vsel %vm192, %v620, 0
      %v650 = vsel %vm192, %v621, 0
      %v653 = vsel %vm192, %v622, 0
      %v656 = vsel %vm192, %v623, 0
      %v659 = vsel %vm192, %v624, 0
      %v662 = vsel %vm192, %v625, 0
      %v665 = vsel %vm192, %v626, 0
      %v668 = vsel %vm192, %v627, 0
      %v671 = vsel %vm192, %v628, 0
      %v674 = vsel %vm192, %v629, 0
      %v677 = vsel %vm192, %v630, 0
      %679 = vmatprep.subr.mxu0 0.0
      %680 = vmatpush1.msra.mxu0 %v613
      %681 = vmatprep.subr.mxu0 0.0
      %682 = vmatpush1.msra.mxu0 %v614
      %683 = vmatprep.subr.mxu0 0.0
      %684 = vmatpush1.msra.mxu0 0.0
      %685 = vmatprep.subr.mxu0 0.0
      %686 = vmatpush1.msra.mxu0 0.0
      %687 = vmatprep.subr.mxu0 0.0
      %688 = vmatpush1.msra.mxu0 0.0
      %689 = vmatprep.subr.mxu0 0.0
      %690 = vmatpush1.msra.mxu0 0.0
      %691 = vmatprep.subr.mxu0 0.0
      %692 = vmatpush1.msra.mxu0 0.0
      %693 = vmatprep.subr.mxu0 0.0
      %694 = vmatpush1.msra.mxu0 0.0
      %695 = vmatprep.subr.mxu0 0.0
      %696 = vmatpush1.msra.mxu0 0.0
      %697 = vmatprep.subr.mxu0 0.0
      %698 = vmatpush1.msra.mxu0 0.0
      %699 = vmatprep.subr.mxu0 0.0
      %700 = vmatpush1.msra.mxu0 0.0
      %701 = vmatprep.subr.mxu0 0.0
      %702 = vmatpush1.msra.mxu0 0.0
      %703 = vmatprep.subr.mxu0 0.0
      %704 = vmatpush1.msra.mxu0 0.0
      %705 = vmatprep.subr.mxu0 0.0
      %706 = vmatpush1.msra.mxu0 0.0
      %707 = vmatprep.subr.mxu0 0.0
      %708 = vmatpush1.msra.mxu0 0.0
      %709 = vmatprep.subr.mxu0 0.0
      %710 = vmatpush1.msra.mxu0 0.0
      %711 = vmatprep.subr.mxu0 0.0
      %712 = vmatpush1.msra.mxu0 0.0
      %713 = vmatprep.subr.mxu0 0.0
      %714 = vmatpush1.msra.mxu0 0.0
      %715 = vmatprep.subr.mxu0 0.0
      %716 = vmatpush1.msra.mxu0 0.0
      %717 = vmatprep.subr.mxu0 0.0
      %718 = vmatpush1.msra.mxu0 0.0
      %719 = vmatprep.subr.mxu0 0.0
      %720 = vmatpush1.msra.mxu0 0.0
      %721 = vmatprep.subr.mxu0 0.0
      %722 = vmatpush1.msra.mxu0 0.0
      %723 = vmatprep.subr.mxu0 0.0
      %724 = vmatpush1.msra.mxu0 0.0
      %725 = vmatprep.subr.mxu0 0.0
      %726 = vmatpush1.msra.mxu0 0.0
      %727 = vmatprep.subr.mxu0 0.0
      %728 = vmatpush1.msra.mxu0 0.0
      %729 = vmatprep.subr.mxu0 0.0
      %730 = vmatpush1.msra.mxu0 0.0
      %731 = vmatprep.subr.mxu0 0.0
      %732 = vmatpush1.msra.mxu0 0.0
      %733 = vmatprep.subr.mxu0 0.0
      %734 = vmatpush1.msra.mxu0 0.0
      %735 = vmatprep.subr.mxu0 0.0
      %736 = vmatpush1.msra.mxu0 0.0
      %737 = vmatprep.subr.mxu0 0.0
      %738 = vmatpush1.msra.mxu0 0.0
      %739 = vmatprep.subr.mxu0 0.0
      %740 = vmatpush1.msra.mxu0 0.0
      %741 = vmatprep.subr.mxu0 0.0
      %742 = vmatpush1.msra.mxu0 0.0
      %743 = vmatprep.mubr.f32.mxu0 0.0
      %744 = vmatmul.mubr.f32.gmra.mrb[0].mxu0 %v632
      %v745 = vpop.f32.mrb[0].mxu0
      %v746 = vadd.f32 0.0, %v745
      %v747 = vpop.f32.mrb[0].mxu0
      %748 = vmatprep.mubr.f32.mxu0 0.0
      %749 = vmatmul.mubr.f32.gmra.mrb[0].mxu0 %v635
      %v750 = vpop.f32.mrb[0].mxu0
      %v751 = vadd.f32 0.0, %v750
      %v752 = vpop.f32.mrb[0].mxu0
      %753 = vmatprep.mubr.f32.mxu0 0.0
      %754 = vmatmul.mubr.f32.gmra.mrb[0].mxu0 %v638
      %v755 = vpop.f32.mrb[0].mxu0
      %v756 = vadd.f32 0.0, %v755
      %v757 = vpop.f32.mrb[0].mxu0
      %758 = vmatprep.mubr.f32.mxu0 0.0
      %759 = vmatmul.mubr.f32.gmra.mrb[0].mxu0 %v641
      %v760 = vpop.f32.mrb[0].mxu0
      %v761 = vadd.f32 0.0, %v760
      %v762 = vpop.f32.mrb[0].mxu0
      %763 = vmatprep.mubr.f32.mxu0 0.0
      %764 = vmatmul.mubr.f32.gmra.mrb[0].mxu0 %v644
      %v765 = vpop.f32.mrb[0].mxu0
      %v766 = vadd.f32 0.0, %v765
      %v767 = vpop.f32.mrb[0].mxu0
      %768 = vmatprep.mubr.f32.mxu0 0.0
      %769 = vmatmul.mubr.f32.gmra.mrb[0].mxu0 %v647
      %v770 = vpop.f32.mrb[0].mxu0
      %v771 = vadd.f32 0.0, %v770
      %v772 = vpop.f32.mrb[0].mxu0
      %773 = vmatprep.mubr.f32.mxu0 0.0
      %774 = vmatmul.mubr.f32.gmra.mrb[0].mxu0 %v650
      %v775 = vpop.f32.mrb[0].mxu0
      %v776 = vadd.f32 0.0, %v775
      %v777 = vpop.f32.mrb[0].mxu0
      %778 = vmatprep.mubr.f32.mxu0 0.0
      %779 = vmatmul.mubr.f32.gmra.mrb[0].mxu0 %v653
      %v780 = vpop.f32.mrb[0].mxu0
      %v781 = vadd.f32 0.0, %v780
      %v782 = vpop.f32.mrb[0].mxu0
      %783 = vmatprep.mubr.f32.mxu0 0.0
      %784 = vmatmul.mubr.f32.gmra.mrb[0].mxu0 %v656
      %v785 = vpop.f32.mrb[0].mxu0
      %v786 = vadd.f32 0.0, %v785
      %v787 = vpop.f32.mrb[0].mxu0
      %788 = vmatprep.mubr.f32.mxu0 0.0
      %789 = vmatmul.mubr.f32.gmra.mrb[0].mxu0 %v659
      %v790 = vpop.f32.mrb[0].mxu0
      %v791 = vadd.f32 0.0, %v790
      %v792 = vpop.f32.mrb[0].mxu0
      %793 = vmatprep.mubr.f32.mxu0 0.0
      %794 = vmatmul.mubr.f32.gmra.mrb[0].mxu0 %v662
      %v795 = vpop.f32.mrb[0].mxu0
      %v796 = vadd.f32 0.0, %v795
      %v797 = vpop.f32.mrb[0].mxu0
      %798 = vmatprep.mubr.f32.mxu0 0.0
      %799 = vmatmul.mubr.f32.gmra.mrb[0].mxu0 %v665
      %v800 = vpop.f32.mrb[0].mxu0
      %v801 = vadd.f32 0.0, %v800
      %v802 = vpop.f32.mrb[0].mxu0
      %803 = vmatprep.mubr.f32.mxu0 0.0
      %804 = vmatmul.mubr.f32.gmra.mrb[0].mxu0 %v668
      %v805 = vpop.f32.mrb[0].mxu0
      %v806 = vadd.f32 0.0, %v805
      %v807 = vpop.f32.mrb[0].mxu0
      %808 = vmatprep.mubr.f32.mxu0 0.0
      %809 = vmatmul.mubr.f32.gmra.mrb[0].mxu0 %v671
      %v810 = vpop.f32.mrb[0].mxu0
      %v811 = vadd.f32 0.0, %v810
      %v812 = vpop.f32.mrb[0].mxu0
      %813 = vmatprep.mubr.f32.mxu0 0.0
      %814 = vmatmul.mubr.f32.gmra.mrb[0].mxu0 %v674
      %v815 = vpop.f32.mrb[0].mxu0
      %v816 = vadd.f32 0.0, %v815
      %v817 = vpop.f32.mrb[0].mxu0
      %818 = vmatprep.mubr.f32.mxu0 0.0
      %819 = vmatmul.mubr.f32.gmra.mrb[0].mxu0 %v677
      %v820 = vpop.f32.mrb[0].mxu0
      %v821 = vadd.f32 0.0, %v820
      %v822 = vpop.f32.mrb[0].mxu0
      %823 = vdwg.mxu0
      %s824 = scalar_lea.vmem [#allocation2], 256
      %825 = vst.msk [vmem:[%s824] sm:$0xff] %vm192, %v746
      %826 = vst.msk [vmem:[%s824 + $0x8] sm:$0xff] %vm192, %v751
      %827 = vst.msk [vmem:[%s824 + $0x10] sm:$0xff] %vm192, %v756
      %828 = vst.msk [vmem:[%s824 + $0x18] sm:$0xff] %vm192, %v761
      %829 = vst.msk [vmem:[%s824 + $0x20] sm:$0xff] %vm192, %v766
      %830 = vst.msk [vmem:[%s824 + $0x28] sm:$0xff] %vm192, %v771
      %831 = vst.msk [vmem:[%s824 + $0x30] sm:$0xff] %vm192, %v776
      %832 = vst.msk [vmem:[%s824 + $0x38] sm:$0xff] %vm192, %v781
      %833 = vst.msk [vmem:[%s824 + $0x40] sm:$0xff] %vm192, %v786
      %834 = vst.msk [vmem:[%s824 + $0x48] sm:$0xff] %vm192, %v791
      %835 = vst.msk [vmem:[%s824 + $0x50] sm:$0xff] %vm192, %v796
      %836 = vst.msk [vmem:[%s824 + $0x58] sm:$0xff] %vm192, %v801
      %837 = vst.msk [vmem:[%s824 + $0x60] sm:$0xff] %vm192, %v806
      %838 = vst.msk [vmem:[%s824 + $0x68] sm:$0xff] %vm192, %v811
      %839 = vst.msk [vmem:[%s824 + $0x70] sm:$0xff] %vm192, %v816
      %840 = vst.msk [vmem:[%s824 + $0x78] sm:$0xff] %vm192, %v821
      %v842 = vsel %vm192, %v746, 0
      %v845 = vsel %vm192, %v751, 0
      %v848 = vsel %vm192, %v756, 0
      %v851 = vsel %vm192, %v761, 0
      %v854 = vsel %vm192, %v766, 0
      %v857 = vsel %vm192, %v771, 0
      %v860 = vsel %vm192, %v776, 0
      %v863 = vsel %vm192, %v781, 0
      %v866 = vsel %vm192, %v786, 0
      %v869 = vsel %vm192, %v791, 0
      %v872 = vsel %vm192, %v796, 0
      %v875 = vsel %vm192, %v801, 0
      %v878 = vsel %vm192, %v806, 0
      %v881 = vsel %vm192, %v811, 0
      %v884 = vsel %vm192, %v816, 0
      %v887 = vsel %vm192, %v821, 0
      %889 = vmatprep.subr.mxu0 0.0
      %890 = vmatpush1.msra.mxu0 %v613
      %891 = vmatprep.subr.mxu0 0.0
      %892 = vmatpush1.msra.mxu0 %v614
      %893 = vmatprep.subr.mxu0 0.0
      %894 = vmatpush1.msra.mxu0 0.0
      %895 = vmatprep.subr.mxu0 0.0
      %896 = vmatpush1.msra.mxu0 0.0
      %897 = vmatprep.subr.mxu0 0.0
      %898 = vmatpush1.msra.mxu0 0.0
      %899 = vmatprep.subr.mxu0 0.0
      %900 = vmatpush1.msra.mxu0 0.0
      %901 = vmatprep.subr.mxu0 0.0
      %902 = vmatpush1.msra.mxu0 0.0
      %903 = vmatprep.subr.mxu0 0.0
      %904 = vmatpush1.msra.mxu0 0.0
      %905 = vmatprep.subr.mxu0 0.0
      %906 = vmatpush1.msra.mxu0 0.0
      %907 = vmatprep.subr.mxu0 0.0
      %908 = vmatpush1.msra.mxu0 0.0
      %909 = vmatprep.subr.mxu0 0.0
      %910 = vmatpush1.msra.mxu0 0.0
      %911 = vmatprep.subr.mxu0 0.0
      %912 = vmatpush1.msra.mxu0 0.0
      %913 = vmatprep.subr.mxu0 0.0
      %914 = vmatpush1.msra.mxu0 0.0
      %915 = vmatprep.subr.mxu0 0.0
      %916 = vmatpush1.msra.mxu0 0.0
      %917 = vmatprep.subr.mxu0 0.0
      %918 = vmatpush1.msra.mxu0 0.0
      %919 = vmatprep.subr.mxu0 0.0
      %920 = vmatpush1.msra.mxu0 0.0
      %921 = vmatprep.subr.mxu0 0.0
      %922 = vmatpush1.msra.mxu0 0.0
      %923 = vmatprep.subr.mxu0 0.0
      %924 = vmatpush1.msra.mxu0 0.0
      %925 = vmatprep.subr.mxu0 0.0
      %926 = vmatpush1.msra.mxu0 0.0
      %927 = vmatprep.subr.mxu0 0.0
      %928 = vmatpush1.msra.mxu0 0.0
      %929 = vmatprep.subr.mxu0 0.0
      %930 = vmatpush1.msra.mxu0 0.0
      %931 = vmatprep.subr.mxu0 0.0
      %932 = vmatpush1.msra.mxu0 0.0
      %933 = vmatprep.subr.mxu0 0.0
      %934 = vmatpush1.msra.mxu0 0.0
      %935 = vmatprep.subr.mxu0 0.0
      %936 = vmatpush1.msra.mxu0 0.0
      %937 = vmatprep.subr.mxu0 0.0
      %938 = vmatpush1.msra.mxu0 0.0
      %939 = vmatprep.subr.mxu0 0.0
      %940 = vmatpush1.msra.mxu0 0.0
      %941 = vmatprep.subr.mxu0 0.0
      %942 = vmatpush1.msra.mxu0 0.0
      %943 = vmatprep.subr.mxu0 0.0
      %944 = vmatpush1.msra.mxu0 0.0
      %945 = vmatprep.subr.mxu0 0.0
      %946 = vmatpush1.msra.mxu0 0.0
      %947 = vmatprep.subr.mxu0 0.0
      %948 = vmatpush1.msra.mxu0 0.0
      %949 = vmatprep.subr.mxu0 0.0
      %950 = vmatpush1.msra.mxu0 0.0
      %951 = vmatprep.subr.mxu0 0.0
      %952 = vmatpush1.msra.mxu0 0.0
      %953 = vmatprep.mubr.f32.mxu0 0.0
      %954 = vmatmul.mubr.f32.gmra.mrb[0].mxu0 %v842
      %v955 = vpop.f32.mrb[0].mxu0
      %v956 = vadd.f32 0.0, %v955
      %v957 = vpop.f32.mrb[0].mxu0
      %958 = vmatprep.mubr.f32.mxu0 0.0
      %959 = vmatmul.mubr.f32.gmra.mrb[0].mxu0 %v845
      %v960 = vpop.f32.mrb[0].mxu0
      %v961 = vadd.f32 0.0, %v960
      %v962 = vpop.f32.mrb[0].mxu0
      %963 = vmatprep.mubr.f32.mxu0 0.0
      %964 = vmatmul.mubr.f32.gmra.mrb[0].mxu0 %v848
      %v965 = vpop.f32.mrb[0].mxu0
      %v966 = vadd.f32 0.0, %v965
      %v967 = vpop.f32.mrb[0].mxu0
      %968 = vmatprep.mubr.f32.mxu0 0.0
      %969 = vmatmul.mubr.f32.gmra.mrb[0].mxu0 %v851
      %v970 = vpop.f32.mrb[0].mxu0
      %v971 = vadd.f32 0.0, %v970
      %v972 = vpop.f32.mrb[0].mxu0
      %973 = vmatprep.mubr.f32.mxu0 0.0
      %974 = vmatmul.mubr.f32.gmra.mrb[0].mxu0 %v854
      %v975 = vpop.f32.mrb[0].mxu0
      %v976 = vadd.f32 0.0, %v975
      %v977 = vpop.f32.mrb[0].mxu0
      %978 = vmatprep.mubr.f32.mxu0 0.0
      %979 = vmatmul.mubr.f32.gmra.mrb[0].mxu0 %v857
      %v980 = vpop.f32.mrb[0].mxu0
      %v981 = vadd.f32 0.0, %v980
      %v982 = vpop.f32.mrb[0].mxu0
      %983 = vmatprep.mubr.f32.mxu0 0.0
      %984 = vmatmul.mubr.f32.gmra.mrb[0].mxu0 %v860
      %v985 = vpop.f32.mrb[0].mxu0
      %v986 = vadd.f32 0.0, %v985
      %v987 = vpop.f32.mrb[0].mxu0
      %988 = vmatprep.mubr.f32.mxu0 0.0
      %989 = vmatmul.mubr.f32.gmra.mrb[0].mxu0 %v863
      %v990 = vpop.f32.mrb[0].mxu0
      %v991 = vadd.f32 0.0, %v990
      %v992 = vpop.f32.mrb[0].mxu0
      %993 = vmatprep.mubr.f32.mxu0 0.0
      %994 = vmatmul.mubr.f32.gmra.mrb[0].mxu0 %v866
      %v995 = vpop.f32.mrb[0].mxu0
      %v996 = vadd.f32 0.0, %v995
      %v997 = vpop.f32.mrb[0].mxu0
      %998 = vmatprep.mubr.f32.mxu0 0.0
      %999 = vmatmul.mubr.f32.gmra.mrb[0].mxu0 %v869
      %v1000 = vpop.f32.mrb[0].mxu0
      %v1001 = vadd.f32 0.0, %v1000
      %v1002 = vpop.f32.mrb[0].mxu0
      %1003 = vmatprep.mubr.f32.mxu0 0.0
      %1004 = vmatmul.mubr.f32.gmra.mrb[0].mxu0 %v872
      %v1005 = vpop.f32.mrb[0].mxu0
      %v1006 = vadd.f32 0.0, %v1005
      %v1007 = vpop.f32.mrb[0].mxu0
      %1008 = vmatprep.mubr.f32.mxu0 0.0
      %1009 = vmatmul.mubr.f32.gmra.mrb[0].mxu0 %v875
      %v1010 = vpop.f32.mrb[0].mxu0
      %v1011 = vadd.f32 0.0, %v1010
      %v1012 = vpop.f32.mrb[0].mxu0
      %1013 = vmatprep.mubr.f32.mxu0 0.0
      %1014 = vmatmul.mubr.f32.gmra.mrb[0].mxu0 %v878
      %v1015 = vpop.f32.mrb[0].mxu0
      %v1016 = vadd.f32 0.0, %v1015
      %v1017 = vpop.f32.mrb[0].mxu0
      %1018 = vmatprep.mubr.f32.mxu0 0.0
      %1019 = vmatmul.mubr.f32.gmra.mrb[0].mxu0 %v881
      %v1020 = vpop.f32.mrb[0].mxu0
      %v1021 = vadd.f32 0.0, %v1020
      %v1022 = vpop.f32.mrb[0].mxu0
      %1023 = vmatprep.mubr.f32.mxu0 0.0
      %1024 = vmatmul.mubr.f32.gmra.mrb[0].mxu0 %v884
      %v1025 = vpop.f32.mrb[0].mxu0
      %v1026 = vadd.f32 0.0, %v1025
      %v1027 = vpop.f32.mrb[0].mxu0
      %1028 = vmatprep.mubr.f32.mxu0 0.0
      %1029 = vmatmul.mubr.f32.gmra.mrb[0].mxu0 %v887
      %v1030 = vpop.f32.mrb[0].mxu0
      %v1031 = vadd.f32 0.0, %v1030
      %v1032 = vpop.f32.mrb[0].mxu0
      %1033 = vdwg.mxu0
      %s1034 = scalar_lea.vmem [#allocation2], 384
      %1035 = vst.msk [vmem:[%s1034] sm:$0xff] %vm192, %v956
      %1036 = vst.msk [vmem:[%s1034 + $0x8] sm:$0xff] %vm192, %v961
      %1037 = vst.msk [vmem:[%s1034 + $0x10] sm:$0xff] %vm192, %v966
      %1038 = vst.msk [vmem:[%s1034 + $0x18] sm:$0xff] %vm192, %v971
      %1039 = vst.msk [vmem:[%s1034 + $0x20] sm:$0xff] %vm192, %v976
      %1040 = vst.msk [vmem:[%s1034 + $0x28] sm:$0xff] %vm192, %v981
      %1041 = vst.msk [vmem:[%s1034 + $0x30] sm:$0xff] %vm192, %v986
      %1042 = vst.msk [vmem:[%s1034 + $0x38] sm:$0xff] %vm192, %v991
      %1043 = vst.msk [vmem:[%s1034 + $0x40] sm:$0xff] %vm192, %v996
      %1044 = vst.msk [vmem:[%s1034 + $0x48] sm:$0xff] %vm192, %v1001
      %1045 = vst.msk [vmem:[%s1034 + $0x50] sm:$0xff] %vm192, %v1006
      %1046 = vst.msk [vmem:[%s1034 + $0x58] sm:$0xff] %vm192, %v1011
      %1047 = vst.msk [vmem:[%s1034 + $0x60] sm:$0xff] %vm192, %v1016
      %1048 = vst.msk [vmem:[%s1034 + $0x68] sm:$0xff] %vm192, %v1021
      %1049 = vst.msk [vmem:[%s1034 + $0x70] sm:$0xff] %vm192, %v1026
      %1050 = vst.msk [vmem:[%s1034 + $0x78] sm:$0xff] %vm192, %v1031
      %s1051 = scalar_lea.vmem %s1, 32
      %v1052 = vld [vmem:[%s1051] sm:$0xff]
      %v1053 = vld [vmem:[%s1051 + $0x8] sm:$0xff]
      %v1054 = vld [vmem:[%s166] sm:$0xff]
      %v1055 = vld [vmem:[%s166 + $0x8] sm:$0xff]
      %v1056 = vld [vmem:[%s166 + $0x10] sm:$0xff]
      %v1057 = vld [vmem:[%s166 + $0x18] sm:$0xff]
      %v1058 = vld [vmem:[%s166 + $0x20] sm:$0xff]
      %v1059 = vld [vmem:[%s166 + $0x28] sm:$0xff]
      %v1060 = vld [vmem:[%s166 + $0x30] sm:$0xff]
      %v1061 = vld [vmem:[%s166 + $0x38] sm:$0xff]
      %v1062 = vld [vmem:[%s166 + $0x40] sm:$0xff]
      %v1063 = vld [vmem:[%s166 + $0x48] sm:$0xff]
      %v1064 = vld [vmem:[%s166 + $0x50] sm:$0xff]
      %v1065 = vld [vmem:[%s166 + $0x58] sm:$0xff]
      %v1066 = vld [vmem:[%s166 + $0x60] sm:$0xff]
      %v1067 = vld [vmem:[%s166 + $0x68] sm:$0xff]
      %v1068 = vld [vmem:[%s166 + $0x70] sm:$0xff]
      %v1069 = vld [vmem:[%s166 + $0x78] sm:$0xff]
      %v1071 = vsel %vm192, %v1054, 0
      %v1074 = vsel %vm192, %v1055, 0
      %v1077 = vsel %vm192, %v1056, 0
      %v1080 = vsel %vm192, %v1057, 0
      %v1083 = vsel %vm192, %v1058, 0
      %v1086 = vsel %vm192, %v1059, 0
      %v1089 = vsel %vm192, %v1060, 0
      %v1092 = vsel %vm192, %v1061, 0
      %v1095 = vsel %vm192, %v1062, 0
      %v1098 = vsel %vm192, %v1063, 0
      %v1101 = vsel %vm192, %v1064, 0
      %v1104 = vsel %vm192, %v1065, 0
      %v1107 = vsel %vm192, %v1066, 0
      %v1110 = vsel %vm192, %v1067, 0
      %v1113 = vsel %vm192, %v1068, 0
      %v1116 = vsel %vm192, %v1069, 0
      %1118 = vmatprep.subr.mxu0 0.0
      %1119 = vmatpush1.msra.mxu0 %v1052
      %1120 = vmatprep.subr.mxu0 0.0
      %1121 = vmatpush1.msra.mxu0 %v1053
      %1122 = vmatprep.subr.mxu0 0.0
      %1123 = vmatpush1.msra.mxu0 0.0
      %1124 = vmatprep.subr.mxu0 0.0
      %1125 = vmatpush1.msra.mxu0 0.0
      %1126 = vmatprep.subr.mxu0 0.0
      %1127 = vmatpush1.msra.mxu0 0.0
      %1128 = vmatprep.subr.mxu0 0.0
      %1129 = vmatpush1.msra.mxu0 0.0
      %1130 = vmatprep.subr.mxu0 0.0
      %1131 = vmatpush1.msra.mxu0 0.0
      %1132 = vmatprep.subr.mxu0 0.0
      %1133 = vmatpush1.msra.mxu0 0.0
      %1134 = vmatprep.subr.mxu0 0.0
      %1135 = vmatpush1.msra.mxu0 0.0
      %1136 = vmatprep.subr.mxu0 0.0
      %1137 = vmatpush1.msra.mxu0 0.0
      %1138 = vmatprep.subr.mxu0 0.0
      %1139 = vmatpush1.msra.mxu0 0.0
      %1140 = vmatprep.subr.mxu0 0.0
      %1141 = vmatpush1.msra.mxu0 0.0
      %1142 = vmatprep.subr.mxu0 0.0
      %1143 = vmatpush1.msra.mxu0 0.0
      %1144 = vmatprep.subr.mxu0 0.0
      %1145 = vmatpush1.msra.mxu0 0.0
      %1146 = vmatprep.subr.mxu0 0.0
      %1147 = vmatpush1.msra.mxu0 0.0
      %1148 = vmatprep.subr.mxu0 0.0
      %1149 = vmatpush1.msra.mxu0 0.0
      %1150 = vmatprep.subr.mxu0 0.0
      %1151 = vmatpush1.msra.mxu0 0.0
      %1152 = vmatprep.subr.mxu0 0.0
      %1153 = vmatpush1.msra.mxu0 0.0
      %1154 = vmatprep.subr.mxu0 0.0
      %1155 = vmatpush1.msra.mxu0 0.0
      %1156 = vmatprep.subr.mxu0 0.0
      %1157 = vmatpush1.msra.mxu0 0.0
      %1158 = vmatprep.subr.mxu0 0.0
      %1159 = vmatpush1.msra.mxu0 0.0
      %1160 = vmatprep.subr.mxu0 0.0
      %1161 = vmatpush1.msra.mxu0 0.0
      %1162 = vmatprep.subr.mxu0 0.0
      %1163 = vmatpush1.msra.mxu0 0.0
      %1164 = vmatprep.subr.mxu0 0.0
      %1165 = vmatpush1.msra.mxu0 0.0
      %1166 = vmatprep.subr.mxu0 0.0
      %1167 = vmatpush1.msra.mxu0 0.0
      %1168 = vmatprep.subr.mxu0 0.0
      %1169 = vmatpush1.msra.mxu0 0.0
      %1170 = vmatprep.subr.mxu0 0.0
      %1171 = vmatpush1.msra.mxu0 0.0
      %1172 = vmatprep.subr.mxu0 0.0
      %1173 = vmatpush1.msra.mxu0 0.0
      %1174 = vmatprep.subr.mxu0 0.0
      %1175 = vmatpush1.msra.mxu0 0.0
      %1176 = vmatprep.subr.mxu0 0.0
      %1177 = vmatpush1.msra.mxu0 0.0
      %1178 = vmatprep.subr.mxu0 0.0
      %1179 = vmatpush1.msra.mxu0 0.0
      %1180 = vmatprep.subr.mxu0 0.0
      %1181 = vmatpush1.msra.mxu0 0.0
      %1182 = vmatprep.mubr.f32.mxu0 0.0
      %1183 = vmatmul.mubr.f32.gmra.mrb[0].mxu0 %v1071
      %v1184 = vpop.f32.mrb[0].mxu0
      %v1185 = vadd.f32 0.0, %v1184
      %v1186 = vpop.f32.mrb[0].mxu0
      %1187 = vmatprep.mubr.f32.mxu0 0.0
      %1188 = vmatmul.mubr.f32.gmra.mrb[0].mxu0 %v1074
      %v1189 = vpop.f32.mrb[0].mxu0
      %v1190 = vadd.f32 0.0, %v1189
      %v1191 = vpop.f32.mrb[0].mxu0
      %1192 = vmatprep.mubr.f32.mxu0 0.0
      %1193 = vmatmul.mubr.f32.gmra.mrb[0].mxu0 %v1077
      %v1194 = vpop.f32.mrb[0].mxu0
      %v1195 = vadd.f32 0.0, %v1194
      %v1196 = vpop.f32.mrb[0].mxu0
      %1197 = vmatprep.mubr.f32.mxu0 0.0
      %1198 = vmatmul.mubr.f32.gmra.mrb[0].mxu0 %v1080
      %v1199 = vpop.f32.mrb[0].mxu0
      %v1200 = vadd.f32 0.0, %v1199
      %v1201 = vpop.f32.mrb[0].mxu0
      %1202 = vmatprep.mubr.f32.mxu0 0.0
      %1203 = vmatmul.mubr.f32.gmra.mrb[0].mxu0 %v1083
      %v1204 = vpop.f32.mrb[0].mxu0
      %v1205 = vadd.f32 0.0, %v1204
      %v1206 = vpop.f32.mrb[0].mxu0
      %1207 = vmatprep.mubr.f32.mxu0 0.0
      %1208 = vmatmul.mubr.f32.gmra.mrb[0].mxu0 %v1086
      %v1209 = vpop.f32.mrb[0].mxu0
      %v1210 = vadd.f32 0.0, %v1209
      %v1211 = vpop.f32.mrb[0].mxu0
      %1212 = vmatprep.mubr.f32.mxu0 0.0
      %1213 = vmatmul.mubr.f32.gmra.mrb[0].mxu0 %v1089
      %v1214 = vpop.f32.mrb[0].mxu0
      %v1215 = vadd.f32 0.0, %v1214
      %v1216 = vpop.f32.mrb[0].mxu0
      %1217 = vmatprep.mubr.f32.mxu0 0.0
      %1218 = vmatmul.mubr.f32.gmra.mrb[0].mxu0 %v1092
      %v1219 = vpop.f32.mrb[0].mxu0
      %v1220 = vadd.f32 0.0, %v1219
      %v1221 = vpop.f32.mrb[0].mxu0
      %1222 = vmatprep.mubr.f32.mxu0 0.0
      %1223 = vmatmul.mubr.f32.gmra.mrb[0].mxu0 %v1095
      %v1224 = vpop.f32.mrb[0].mxu0
      %v1225 = vadd.f32 0.0, %v1224
      %v1226 = vpop.f32.mrb[0].mxu0
      %1227 = vmatprep.mubr.f32.mxu0 0.0
      %1228 = vmatmul.mubr.f32.gmra.mrb[0].mxu0 %v1098
      %v1229 = vpop.f32.mrb[0].mxu0
      %v1230 = vadd.f32 0.0, %v1229
      %v1231 = vpop.f32.mrb[0].mxu0
      %1232 = vmatprep.mubr.f32.mxu0 0.0
      %1233 = vmatmul.mubr.f32.gmra.mrb[0].mxu0 %v1101
      %v1234 = vpop.f32.mrb[0].mxu0
      %v1235 = vadd.f32 0.0, %v1234
      %v1236 = vpop.f32.mrb[0].mxu0
      %1237 = vmatprep.mubr.f32.mxu0 0.0
      %1238 = vmatmul.mubr.f32.gmra.mrb[0].mxu0 %v1104
      %v1239 = vpop.f32.mrb[0].mxu0
      %v1240 = vadd.f32 0.0, %v1239
      %v1241 = vpop.f32.mrb[0].mxu0
      %1242 = vmatprep.mubr.f32.mxu0 0.0
      %1243 = vmatmul.mubr.f32.gmra.mrb[0].mxu0 %v1107
      %v1244 = vpop.f32.mrb[0].mxu0
      %v1245 = vadd.f32 0.0, %v1244
      %v1246 = vpop.f32.mrb[0].mxu0
      %1247 = vmatprep.mubr.f32.mxu0 0.0
      %1248 = vmatmul.mubr.f32.gmra.mrb[0].mxu0 %v1110
      %v1249 = vpop.f32.mrb[0].mxu0
      %v1250 = vadd.f32 0.0, %v1249
      %v1251 = vpop.f32.mrb[0].mxu0
      %1252 = vmatprep.mubr.f32.mxu0 0.0
      %1253 = vmatmul.mubr.f32.gmra.mrb[0].mxu0 %v1113
      %v1254 = vpop.f32.mrb[0].mxu0
      %v1255 = vadd.f32 0.0, %v1254
      %v1256 = vpop.f32.mrb[0].mxu0
      %1257 = vmatprep.mubr.f32.mxu0 0.0
      %1258 = vmatmul.mubr.f32.gmra.mrb[0].mxu0 %v1116
      %v1259 = vpop.f32.mrb[0].mxu0
      %v1260 = vadd.f32 0.0, %v1259
      %v1261 = vpop.f32.mrb[0].mxu0
      %1262 = vdwg.mxu0
      %s1263 = scalar_lea.vmem [#allocation2], 512
      %1264 = vst.msk [vmem:[%s1263] sm:$0xff] %vm192, %v1185
      %1265 = vst.msk [vmem:[%s1263 + $0x8] sm:$0xff] %vm192, %v1190
      %1266 = vst.msk [vmem:[%s1263 + $0x10] sm:$0xff] %vm192, %v1195
      %1267 = vst.msk [vmem:[%s1263 + $0x18] sm:$0xff] %vm192, %v1200
      %1268 = vst.msk [vmem:[%s1263 + $0x20] sm:$0xff] %vm192, %v1205
      %1269 = vst.msk [vmem:[%s1263 + $0x28] sm:$0xff] %vm192, %v1210
      %1270 = vst.msk [vmem:[%s1263 + $0x30] sm:$0xff] %vm192, %v1215
      %1271 = vst.msk [vmem:[%s1263 + $0x38] sm:$0xff] %vm192, %v1220
      %1272 = vst.msk [vmem:[%s1263 + $0x40] sm:$0xff] %vm192, %v1225
      %1273 = vst.msk [vmem:[%s1263 + $0x48] sm:$0xff] %vm192, %v1230
      %1274 = vst.msk [vmem:[%s1263 + $0x50] sm:$0xff] %vm192, %v1235
      %1275 = vst.msk [vmem:[%s1263 + $0x58] sm:$0xff] %vm192, %v1240
      %1276 = vst.msk [vmem:[%s1263 + $0x60] sm:$0xff] %vm192, %v1245
      %1277 = vst.msk [vmem:[%s1263 + $0x68] sm:$0xff] %vm192, %v1250
      %1278 = vst.msk [vmem:[%s1263 + $0x70] sm:$0xff] %vm192, %v1255
      %1279 = vst.msk [vmem:[%s1263 + $0x78] sm:$0xff] %vm192, %v1260
      %v1281 = vsel %vm192, %v1185, 0
      %v1284 = vsel %vm192, %v1190, 0
      %v1287 = vsel %vm192, %v1195, 0
      %v1290 = vsel %vm192, %v1200, 0
      %v1293 = vsel %vm192, %v1205, 0
      %v1296 = vsel %vm192, %v1210, 0
      %v1299 = vsel %vm192, %v1215, 0
      %v1302 = vsel %vm192, %v1220, 0
      %v1305 = vsel %vm192, %v1225, 0
      %v1308 = vsel %vm192, %v1230, 0
      %v1311 = vsel %vm192, %v1235, 0
      %v1314 = vsel %vm192, %v1240, 0
      %v1317 = vsel %vm192, %v1245, 0
      %v1320 = vsel %vm192, %v1250, 0
      %v1323 = vsel %vm192, %v1255, 0
      %v1326 = vsel %vm192, %v1260, 0
      %1328 = vmatprep.subr.mxu0 0.0
      %1329 = vmatpush1.msra.mxu0 %v1052
      %1330 = vmatprep.subr.mxu0 0.0
      %1331 = vmatpush1.msra.mxu0 %v1053
      %1332 = vmatprep.subr.mxu0 0.0
      %1333 = vmatpush1.msra.mxu0 0.0
      %1334 = vmatprep.subr.mxu0 0.0
      %1335 = vmatpush1.msra.mxu0 0.0
      %1336 = vmatprep.subr.mxu0 0.0
      %1337 = vmatpush1.msra.mxu0 0.0
      %1338 = vmatprep.subr.mxu0 0.0
      %1339 = vmatpush1.msra.mxu0 0.0
      %1340 = vmatprep.subr.mxu0 0.0
      %1341 = vmatpush1.msra.mxu0 0.0
      %1342 = vmatprep.subr.mxu0 0.0
      %1343 = vmatpush1.msra.mxu0 0.0
      %1344 = vmatprep.subr.mxu0 0.0
      %1345 = vmatpush1.msra.mxu0 0.0
      %1346 = vmatprep.subr.mxu0 0.0
      %1347 = vmatpush1.msra.mxu0 0.0
      %1348 = vmatprep.subr.mxu0 0.0
      %1349 = vmatpush1.msra.mxu0 0.0
      %1350 = vmatprep.subr.mxu0 0.0
      %1351 = vmatpush1.msra.mxu0 0.0
      %1352 = vmatprep.subr.mxu0 0.0
      %1353 = vmatpush1.msra.mxu0 0.0
      %1354 = vmatprep.subr.mxu0 0.0
      %1355 = vmatpush1.msra.mxu0 0.0
      %1356 = vmatprep.subr.mxu0 0.0
      %1357 = vmatpush1.msra.mxu0 0.0
      %1358 = vmatprep.subr.mxu0 0.0
      %1359 = vmatpush1.msra.mxu0 0.0
      %1360 = vmatprep.subr.mxu0 0.0
      %1361 = vmatpush1.msra.mxu0 0.0
      %1362 = vmatprep.subr.mxu0 0.0
      %1363 = vmatpush1.msra.mxu0 0.0
      %1364 = vmatprep.subr.mxu0 0.0
      %1365 = vmatpush1.msra.mxu0 0.0
      %1366 = vmatprep.subr.mxu0 0.0
      %1367 = vmatpush1.msra.mxu0 0.0
      %1368 = vmatprep.subr.mxu0 0.0
      %1369 = vmatpush1.msra.mxu0 0.0
      %1370 = vmatprep.subr.mxu0 0.0
      %1371 = vmatpush1.msra.mxu0 0.0
      %1372 = vmatprep.subr.mxu0 0.0
      %1373 = vmatpush1.msra.mxu0 0.0
      %1374 = vmatprep.subr.mxu0 0.0
      %1375 = vmatpush1.msra.mxu0 0.0
      %1376 = vmatprep.subr.mxu0 0.0
      %1377 = vmatpush1.msra.mxu0 0.0
      %1378 = vmatprep.subr.mxu0 0.0
      %1379 = vmatpush1.msra.mxu0 0.0
      %1380 = vmatprep.subr.mxu0 0.0
      %1381 = vmatpush1.msra.mxu0 0.0
      %1382 = vmatprep.subr.mxu0 0.0
      %1383 = vmatpush1.msra.mxu0 0.0
      %1384 = vmatprep.subr.mxu0 0.0
      %1385 = vmatpush1.msra.mxu0 0.0
      %1386 = vmatprep.subr.mxu0 0.0
      %1387 = vmatpush1.msra.mxu0 0.0
      %1388 = vmatprep.subr.mxu0 0.0
      %1389 = vmatpush1.msra.mxu0 0.0
      %1390 = vmatprep.subr.mxu0 0.0
      %1391 = vmatpush1.msra.mxu0 0.0
      %1392 = vmatprep.mubr.f32.mxu0 0.0
      %1393 = vmatmul.mubr.f32.gmra.mrb[0].mxu0 %v1281
      %v1394 = vpop.f32.mrb[0].mxu0
      %v1395 = vadd.f32 0.0, %v1394
      %v1396 = vpop.f32.mrb[0].mxu0
      %1397 = vmatprep.mubr.f32.mxu0 0.0
      %1398 = vmatmul.mubr.f32.gmra.mrb[0].mxu0 %v1284
      %v1399 = vpop.f32.mrb[0].mxu0
      %v1400 = vadd.f32 0.0, %v1399
      %v1401 = vpop.f32.mrb[0].mxu0
      %1402 = vmatprep.mubr.f32.mxu0 0.0
      %1403 = vmatmul.mubr.f32.gmra.mrb[0].mxu0 %v1287
      %v1404 = vpop.f32.mrb[0].mxu0
      %v1405 = vadd.f32 0.0, %v1404
      %v1406 = vpop.f32.mrb[0].mxu0
      %1407 = vmatprep.mubr.f32.mxu0 0.0
      %1408 = vmatmul.mubr.f32.gmra.mrb[0].mxu0 %v1290
      %v1409 = vpop.f32.mrb[0].mxu0
      %v1410 = vadd.f32 0.0, %v1409
      %v1411 = vpop.f32.mrb[0].mxu0
      %1412 = vmatprep.mubr.f32.mxu0 0.0
      %1413 = vmatmul.mubr.f32.gmra.mrb[0].mxu0 %v1293
      %v1414 = vpop.f32.mrb[0].mxu0
      %v1415 = vadd.f32 0.0, %v1414
      %v1416 = vpop.f32.mrb[0].mxu0
      %1417 = vmatprep.mubr.f32.mxu0 0.0
      %1418 = vmatmul.mubr.f32.gmra.mrb[0].mxu0 %v1296
      %v1419 = vpop.f32.mrb[0].mxu0
      %v1420 = vadd.f32 0.0, %v1419
      %v1421 = vpop.f32.mrb[0].mxu0
      %1422 = vmatprep.mubr.f32.mxu0 0.0
      %1423 = vmatmul.mubr.f32.gmra.mrb[0].mxu0 %v1299
      %v1424 = vpop.f32.mrb[0].mxu0
      %v1425 = vadd.f32 0.0, %v1424
      %v1426 = vpop.f32.mrb[0].mxu0
      %1427 = vmatprep.mubr.f32.mxu0 0.0
      %1428 = vmatmul.mubr.f32.gmra.mrb[0].mxu0 %v1302
      %v1429 = vpop.f32.mrb[0].mxu0
      %v1430 = vadd.f32 0.0, %v1429
      %v1431 = vpop.f32.mrb[0].mxu0
      %1432 = vmatprep.mubr.f32.mxu0 0.0
      %1433 = vmatmul.mubr.f32.gmra.mrb[0].mxu0 %v1305
      %v1434 = vpop.f32.mrb[0].mxu0
      %v1435 = vadd.f32 0.0, %v1434
      %v1436 = vpop.f32.mrb[0].mxu0
      %1437 = vmatprep.mubr.f32.mxu0 0.0
      %1438 = vmatmul.mubr.f32.gmra.mrb[0].mxu0 %v1308
      %v1439 = vpop.f32.mrb[0].mxu0
      %v1440 = vadd.f32 0.0, %v1439
      %v1441 = vpop.f32.mrb[0].mxu0
      %1442 = vmatprep.mubr.f32.mxu0 0.0
      %1443 = vmatmul.mubr.f32.gmra.mrb[0].mxu0 %v1311
      %v1444 = vpop.f32.mrb[0].mxu0
      %v1445 = vadd.f32 0.0, %v1444
      %v1446 = vpop.f32.mrb[0].mxu0
      %1447 = vmatprep.mubr.f32.mxu0 0.0
      %1448 = vmatmul.mubr.f32.gmra.mrb[0].mxu0 %v1314
      %v1449 = vpop.f32.mrb[0].mxu0
      %v1450 = vadd.f32 0.0, %v1449
      %v1451 = vpop.f32.mrb[0].mxu0
      %1452 = vmatprep.mubr.f32.mxu0 0.0
      %1453 = vmatmul.mubr.f32.gmra.mrb[0].mxu0 %v1317
      %v1454 = vpop.f32.mrb[0].mxu0
      %v1455 = vadd.f32 0.0, %v1454
      %v1456 = vpop.f32.mrb[0].mxu0
      %1457 = vmatprep.mubr.f32.mxu0 0.0
      %1458 = vmatmul.mubr.f32.gmra.mrb[0].mxu0 %v1320
      %v1459 = vpop.f32.mrb[0].mxu0
      %v1460 = vadd.f32 0.0, %v1459
      %v1461 = vpop.f32.mrb[0].mxu0
      %1462 = vmatprep.mubr.f32.mxu0 0.0
      %1463 = vmatmul.mubr.f32.gmra.mrb[0].mxu0 %v1323
      %v1464 = vpop.f32.mrb[0].mxu0
      %v1465 = vadd.f32 0.0, %v1464
      %v1466 = vpop.f32.mrb[0].mxu0
      %1467 = vmatprep.mubr.f32.mxu0 0.0
      %1468 = vmatmul.mubr.f32.gmra.mrb[0].mxu0 %v1326
      %v1469 = vpop.f32.mrb[0].mxu0
      %v1470 = vadd.f32 0.0, %v1469
      %v1471 = vpop.f32.mrb[0].mxu0
      %1472 = vdwg.mxu0
      %s1473 = scalar_lea.vmem [#allocation2], 640
      %1474 = vst.msk [vmem:[%s1473] sm:$0xff] %vm192, %v1395
      %1475 = vst.msk [vmem:[%s1473 + $0x8] sm:$0xff] %vm192, %v1400
      %1476 = vst.msk [vmem:[%s1473 + $0x10] sm:$0xff] %vm192, %v1405
      %1477 = vst.msk [vmem:[%s1473 + $0x18] sm:$0xff] %vm192, %v1410
      %1478 = vst.msk [vmem:[%s1473 + $0x20] sm:$0xff] %vm192, %v1415
      %1479 = vst.msk [vmem:[%s1473 + $0x28] sm:$0xff] %vm192, %v1420
      %1480 = vst.msk [vmem:[%s1473 + $0x30] sm:$0xff] %vm192, %v1425
      %1481 = vst.msk [vmem:[%s1473 + $0x38] sm:$0xff] %vm192, %v1430
      %1482 = vst.msk [vmem:[%s1473 + $0x40] sm:$0xff] %vm192, %v1435
      %1483 = vst.msk [vmem:[%s1473 + $0x48] sm:$0xff] %vm192, %v1440
      %1484 = vst.msk [vmem:[%s1473 + $0x50] sm:$0xff] %vm192, %v1445
      %1485 = vst.msk [vmem:[%s1473 + $0x58] sm:$0xff] %vm192, %v1450
      %1486 = vst.msk [vmem:[%s1473 + $0x60] sm:$0xff] %vm192, %v1455
      %1487 = vst.msk [vmem:[%s1473 + $0x68] sm:$0xff] %vm192, %v1460
      %1488 = vst.msk [vmem:[%s1473 + $0x70] sm:$0xff] %vm192, %v1465
      %1489 = vst.msk [vmem:[%s1473 + $0x78] sm:$0xff] %vm192, %v1470
      %v1490 = vld [vmem:[%s2] sm:$0xff]
      %v1491 = vld [vmem:[%s2 + $0x8] sm:$0xff]
      %s1492 = scalar_lea.vmem %s2, 16
      %v1493 = vld [vmem:[%s1492] sm:$0xff]
      %v1494 = vld [vmem:[%s1492 + $0x8] sm:$0xff]
      %s1495 = scalar_lea.vmem %s2, 32
      %v1496 = vld [vmem:[%s1495] sm:$0xff]
      %v1497 = vld [vmem:[%s1495 + $0x8] sm:$0xff]
      %s1498 = scalar_lea.vmem %s2, 48
      %v1499 = vld [vmem:[%s1498] sm:$0xff]
      %v1500 = vld [vmem:[%s1498 + $0x8] sm:$0xff]
      %s1501 = scalar_lea.vmem %s2, 64
      %v1502 = vld [vmem:[%s1501] sm:$0xff]
      %v1503 = vld [vmem:[%s1501 + $0x8] sm:$0xff]
      %s1504 = scalar_lea.vmem %s2, 80
      %v1505 = vld [vmem:[%s1504] sm:$0xff]
      %v1506 = vld [vmem:[%s1504 + $0x8] sm:$0xff]
      %s1507 = scalar_lea.vmem %s2, 96
      %v1508 = vld [vmem:[%s1507] sm:$0xff]
      %v1509 = vld [vmem:[%s1507 + $0x8] sm:$0xff]
      loop: start=0, step=1, limit=8
      $region33: #{tpu_custom_call.1} parent=31 // loop_pre_header
        _
      $region34: #{tpu_custom_call.1} parent=31 // loop_header
        %s1511 = sphi 0, %s1515
        %p1512 = scmp.ge.s32.totalorder %s1511, 8
      $region35: #{tpu_custom_call.1} parent=31 // loop_header_branch
        %1514 = sbr.rel (%p1512) target = $region39
      $region36: #{tpu_custom_call.1} parent=31 // loop_body
        %s1516 = smul.u32 %s1511, 16
        %s1517 = scalar_lea.vmem %s166, %s1516
        %v1518 = vld [vmem:[%s1517] sm:$0xff]
        %v1519 = vld [vmem:[%s1517 + $0x8] sm:$0xff]
        %s1520 = scalar_lea.vmem [#allocation2], %s1516
        %v1521 = vld [vmem:[%s1520] sm:$0xff]
        %v1522 = vld [vmem:[%s1520 + $0x8] sm:$0xff]
        %v1524 = vsel %vm192, %v1493, 0
        %v1527 = vsel %vm192, %v1494, 0
        %1529 = vmatprep.subr.mxu0 0.0
        %1530 = vmatpush1.msra.mxu0 %v1521
        %1531 = vmatprep.subr.mxu0 0.0
        %1532 = vmatpush1.msra.mxu0 %v1522
        %1533 = vmatprep.subr.mxu0 0.0
        %1534 = vmatpush1.msra.mxu0 0.0
        %1535 = vmatprep.subr.mxu0 0.0
        %1536 = vmatpush1.msra.mxu0 0.0
        %1537 = vmatprep.subr.mxu0 0.0
        %1538 = vmatpush1.msra.mxu0 0.0
        %1539 = vmatprep.subr.mxu0 0.0
        %1540 = vmatpush1.msra.mxu0 0.0
        %1541 = vmatprep.subr.mxu0 0.0
        %1542 = vmatpush1.msra.mxu0 0.0
        %1543 = vmatprep.subr.mxu0 0.0
        %1544 = vmatpush1.msra.mxu0 0.0
        %1545 = vmatprep.subr.mxu0 0.0
        %1546 = vmatpush1.msra.mxu0 0.0
        %1547 = vmatprep.subr.mxu0 0.0
        %1548 = vmatpush1.msra.mxu0 0.0
        %1549 = vmatprep.subr.mxu0 0.0
        %1550 = vmatpush1.msra.mxu0 0.0
        %1551 = vmatprep.subr.mxu0 0.0
        %1552 = vmatpush1.msra.mxu0 0.0
        %1553 = vmatprep.subr.mxu0 0.0
        %1554 = vmatpush1.msra.mxu0 0.0
        %1555 = vmatprep.subr.mxu0 0.0
        %1556 = vmatpush1.msra.mxu0 0.0
        %1557 = vmatprep.subr.mxu0 0.0
        %1558 = vmatpush1.msra.mxu0 0.0
        %1559 = vmatprep.subr.mxu0 0.0
        %1560 = vmatpush1.msra.mxu0 0.0
        %1561 = vmatprep.subr.mxu0 0.0
        %1562 = vmatpush1.msra.mxu0 0.0
        %1563 = vmatprep.subr.mxu0 0.0
        %1564 = vmatpush1.msra.mxu0 0.0
        %1565 = vmatprep.subr.mxu0 0.0
        %1566 = vmatpush1.msra.mxu0 0.0
        %1567 = vmatprep.subr.mxu0 0.0
        %1568 = vmatpush1.msra.mxu0 0.0
        %1569 = vmatprep.subr.mxu0 0.0
        %1570 = vmatpush1.msra.mxu0 0.0
        %1571 = vmatprep.subr.mxu0 0.0
        %1572 = vmatpush1.msra.mxu0 0.0
        %1573 = vmatprep.subr.mxu0 0.0
        %1574 = vmatpush1.msra.mxu0 0.0
        %1575 = vmatprep.subr.mxu0 0.0
        %1576 = vmatpush1.msra.mxu0 0.0
        %1577 = vmatprep.subr.mxu0 0.0
        %1578 = vmatpush1.msra.mxu0 0.0
        %1579 = vmatprep.subr.mxu0 0.0
        %1580 = vmatpush1.msra.mxu0 0.0
        %1581 = vmatprep.subr.mxu0 0.0
        %1582 = vmatpush1.msra.mxu0 0.0
        %1583 = vmatprep.subr.mxu0 0.0
        %1584 = vmatpush1.msra.mxu0 0.0
        %1585 = vmatprep.subr.mxu0 0.0
        %1586 = vmatpush1.msra.mxu0 0.0
        %1587 = vmatprep.subr.mxu0 0.0
        %1588 = vmatpush1.msra.mxu0 0.0
        %1589 = vmatprep.subr.mxu0 0.0
        %1590 = vmatpush1.msra.mxu0 0.0
        %1591 = vmatprep.subr.mxu0 0.0
        %1592 = vmatpush1.msra.mxu0 0.0
        %1593 = vmatprep.mubr.f32.mxu0 0.0
        %1594 = vmatmul.mubr.f32.gmra.mrb[0].mxu0 %v1524
        %v1595 = vpop.f32.mrb[0].mxu0
        %v1596 = vadd.f32 0.0, %v1595
        %v1597 = vpop.f32.mrb[0].mxu0
        %1598 = vmatprep.mubr.f32.mxu0 0.0
        %1599 = vmatmul.mubr.f32.gmra.mrb[0].mxu0 %v1527
        %v1600 = vpop.f32.mrb[0].mxu0
        %v1601 = vadd.f32 0.0, %v1600
        %v1602 = vpop.f32.mrb[0].mxu0
        %1603 = vdwg.mxu0
        %v1605 = vsel %vm192, %v1490, 0
        %v1608 = vsel %vm192, %v1491, 0
        %1610 = vmatprep.subr.mxu0 0.0
        %1611 = vmatpush1.msra.mxu0 %v1518
        %1612 = vmatprep.subr.mxu0 0.0
        %1613 = vmatpush1.msra.mxu0 %v1519
        %1614 = vmatprep.subr.mxu0 0.0
        %1615 = vmatpush1.msra.mxu0 0.0
        %1616 = vmatprep.subr.mxu0 0.0
        %1617 = vmatpush1.msra.mxu0 0.0
        %1618 = vmatprep.subr.mxu0 0.0
        %1619 = vmatpush1.msra.mxu0 0.0
        %1620 = vmatprep.subr.mxu0 0.0
        %1621 = vmatpush1.msra.mxu0 0.0
        %1622 = vmatprep.subr.mxu0 0.0
        %1623 = vmatpush1.msra.mxu0 0.0
        %1624 = vmatprep.subr.mxu0 0.0
        %1625 = vmatpush1.msra.mxu0 0.0
        %1626 = vmatprep.subr.mxu0 0.0
        %1627 = vmatpush1.msra.mxu0 0.0
        %1628 = vmatprep.subr.mxu0 0.0
        %1629 = vmatpush1.msra.mxu0 0.0
        %1630 = vmatprep.subr.mxu0 0.0
        %1631 = vmatpush1.msra.mxu0 0.0
        %1632 = vmatprep.subr.mxu0 0.0
        %1633 = vmatpush1.msra.mxu0 0.0
        %1634 = vmatprep.subr.mxu0 0.0
        %1635 = vmatpush1.msra.mxu0 0.0
        %1636 = vmatprep.subr.mxu0 0.0
        %1637 = vmatpush1.msra.mxu0 0.0
        %1638 = vmatprep.subr.mxu0 0.0
        %1639 = vmatpush1.msra.mxu0 0.0
        %1640 = vmatprep.subr.mxu0 0.0
        %1641 = vmatpush1.msra.mxu0 0.0
        %1642 = vmatprep.subr.mxu0 0.0
        %1643 = vmatpush1.msra.mxu0 0.0
        %1644 = vmatprep.subr.mxu0 0.0
        %1645 = vmatpush1.msra.mxu0 0.0
        %1646 = vmatprep.subr.mxu0 0.0
        %1647 = vmatpush1.msra.mxu0 0.0
        %1648 = vmatprep.subr.mxu0 0.0
        %1649 = vmatpush1.msra.mxu0 0.0
        %1650 = vmatprep.subr.mxu0 0.0
        %1651 = vmatpush1.msra.mxu0 0.0
        %1652 = vmatprep.subr.mxu0 0.0
        %1653 = vmatpush1.msra.mxu0 0.0
        %1654 = vmatprep.subr.mxu0 0.0
        %1655 = vmatpush1.msra.mxu0 0.0
        %1656 = vmatprep.subr.mxu0 0.0
        %1657 = vmatpush1.msra.mxu0 0.0
        %1658 = vmatprep.subr.mxu0 0.0
        %1659 = vmatpush1.msra.mxu0 0.0
        %1660 = vmatprep.subr.mxu0 0.0
        %1661 = vmatpush1.msra.mxu0 0.0
        %1662 = vmatprep.subr.mxu0 0.0
        %1663 = vmatpush1.msra.mxu0 0.0
        %1664 = vmatprep.subr.mxu0 0.0
        %1665 = vmatpush1.msra.mxu0 0.0
        %1666 = vmatprep.subr.mxu0 0.0
        %1667 = vmatpush1.msra.mxu0 0.0
        %1668 = vmatprep.subr.mxu0 0.0
        %1669 = vmatpush1.msra.mxu0 0.0
        %1670 = vmatprep.subr.mxu0 0.0
        %1671 = vmatpush1.msra.mxu0 0.0
        %1672 = vmatprep.subr.mxu0 0.0
        %1673 = vmatpush1.msra.mxu0 0.0
        %1674 = vmatprep.mubr.f32.mxu0 0.0
        %1675 = vmatmul.mubr.f32.gmra.mrb[0].mxu0 %v1605
        %v1676 = vpop.f32.mrb[0].mxu0
        %v1677 = vadd.f32 %v1596, %v1676
        %v1678 = vpop.f32.mrb[0].mxu0
        %1679 = vmatprep.mubr.f32.mxu0 0.0
        %1680 = vmatmul.mubr.f32.gmra.mrb[0].mxu0 %v1608
        %v1681 = vpop.f32.mrb[0].mxu0
        %v1682 = vadd.f32 %v1601, %v1681
        %v1683 = vpop.f32.mrb[0].mxu0
        %1684 = vdwg.mxu0
        %s1685 = sadd.s32 %s1516, 128
        %s1686 = scalar_lea.vmem [#allocation2], %s1685
        %v1687 = vld [vmem:[%s1686] sm:$0xff]
        %v1688 = vld [vmem:[%s1686 + $0x8] sm:$0xff]
        %v1690 = vsel %vm192, %v1496, 0
        %v1693 = vsel %vm192, %v1497, 0
        %1695 = vmatprep.subr.mxu0 0.0
        %1696 = vmatpush1.msra.mxu0 %v1687
        %1697 = vmatprep.subr.mxu0 0.0
        %1698 = vmatpush1.msra.mxu0 %v1688
        %1699 = vmatprep.subr.mxu0 0.0
        %1700 = vmatpush1.msra.mxu0 0.0
        %1701 = vmatprep.subr.mxu0 0.0
        %1702 = vmatpush1.msra.mxu0 0.0
        %1703 = vmatprep.subr.mxu0 0.0
        %1704 = vmatpush1.msra.mxu0 0.0
        %1705 = vmatprep.subr.mxu0 0.0
        %1706 = vmatpush1.msra.mxu0 0.0
        %1707 = vmatprep.subr.mxu0 0.0
        %1708 = vmatpush1.msra.mxu0 0.0
        %1709 = vmatprep.subr.mxu0 0.0
        %1710 = vmatpush1.msra.mxu0 0.0
        %1711 = vmatprep.subr.mxu0 0.0
        %1712 = vmatpush1.msra.mxu0 0.0
        %1713 = vmatprep.subr.mxu0 0.0
        %1714 = vmatpush1.msra.mxu0 0.0
        %1715 = vmatprep.subr.mxu0 0.0
        %1716 = vmatpush1.msra.mxu0 0.0
        %1717 = vmatprep.subr.mxu0 0.0
        %1718 = vmatpush1.msra.mxu0 0.0
        %1719 = vmatprep.subr.mxu0 0.0
        %1720 = vmatpush1.msra.mxu0 0.0
        %1721 = vmatprep.subr.mxu0 0.0
        %1722 = vmatpush1.msra.mxu0 0.0
        %1723 = vmatprep.subr.mxu0 0.0
        %1724 = vmatpush1.msra.mxu0 0.0
        %1725 = vmatprep.subr.mxu0 0.0
        %1726 = vmatpush1.msra.mxu0 0.0
        %1727 = vmatprep.subr.mxu0 0.0
        %1728 = vmatpush1.msra.mxu0 0.0
        %1729 = vmatprep.subr.mxu0 0.0
        %1730 = vmatpush1.msra.mxu0 0.0
        %1731 = vmatprep.subr.mxu0 0.0
        %1732 = vmatpush1.msra.mxu0 0.0
        %1733 = vmatprep.subr.mxu0 0.0
        %1734 = vmatpush1.msra.mxu0 0.0
        %1735 = vmatprep.subr.mxu0 0.0
        %1736 = vmatpush1.msra.mxu0 0.0
        %1737 = vmatprep.subr.mxu0 0.0
        %1738 = vmatpush1.msra.mxu0 0.0
        %1739 = vmatprep.subr.mxu0 0.0
        %1740 = vmatpush1.msra.mxu0 0.0
        %1741 = vmatprep.subr.mxu0 0.0
        %1742 = vmatpush1.msra.mxu0 0.0
        %1743 = vmatprep.subr.mxu0 0.0
        %1744 = vmatpush1.msra.mxu0 0.0
        %1745 = vmatprep.subr.mxu0 0.0
        %1746 = vmatpush1.msra.mxu0 0.0
        %1747 = vmatprep.subr.mxu0 0.0
        %1748 = vmatpush1.msra.mxu0 0.0
        %1749 = vmatprep.subr.mxu0 0.0
        %1750 = vmatpush1.msra.mxu0 0.0
        %1751 = vmatprep.subr.mxu0 0.0
        %1752 = vmatpush1.msra.mxu0 0.0
        %1753 = vmatprep.subr.mxu0 0.0
        %1754 = vmatpush1.msra.mxu0 0.0
        %1755 = vmatprep.subr.mxu0 0.0
        %1756 = vmatpush1.msra.mxu0 0.0
        %1757 = vmatprep.subr.mxu0 0.0
        %1758 = vmatpush1.msra.mxu0 0.0
        %1759 = vmatprep.mubr.f32.mxu0 0.0
        %1760 = vmatmul.mubr.f32.gmra.mrb[0].mxu0 %v1690
        %v1761 = vpop.f32.mrb[0].mxu0
        %v1762 = vadd.f32 0.0, %v1761
        %v1763 = vpop.f32.mrb[0].mxu0
        %1764 = vmatprep.mubr.f32.mxu0 0.0
        %1765 = vmatmul.mubr.f32.gmra.mrb[0].mxu0 %v1693
        %v1766 = vpop.f32.mrb[0].mxu0
        %v1767 = vadd.f32 0.0, %v1766
        %v1768 = vpop.f32.mrb[0].mxu0
        %1769 = vdwg.mxu0
        %v1770 = vadd.f32 %v1677, %v1762
        %v1771 = vadd.f32 %v1682, %v1767
        %s1772 = sadd.s32 %s1516, 256
        %s1773 = scalar_lea.vmem [#allocation2], %s1772
        %v1774 = vld [vmem:[%s1773] sm:$0xff]
        %v1775 = vld [vmem:[%s1773 + $0x8] sm:$0xff]
        %v1777 = vsel %vm192, %v1499, 0
        %v1780 = vsel %vm192, %v1500, 0
        %1782 = vmatprep.subr.mxu0 0.0
        %1783 = vmatpush1.msra.mxu0 %v1774
        %1784 = vmatprep.subr.mxu0 0.0
        %1785 = vmatpush1.msra.mxu0 %v1775
        %1786 = vmatprep.subr.mxu0 0.0
        %1787 = vmatpush1.msra.mxu0 0.0
        %1788 = vmatprep.subr.mxu0 0.0
        %1789 = vmatpush1.msra.mxu0 0.0
        %1790 = vmatprep.subr.mxu0 0.0
        %1791 = vmatpush1.msra.mxu0 0.0
        %1792 = vmatprep.subr.mxu0 0.0
        %1793 = vmatpush1.msra.mxu0 0.0
        %1794 = vmatprep.subr.mxu0 0.0
        %1795 = vmatpush1.msra.mxu0 0.0
        %1796 = vmatprep.subr.mxu0 0.0
        %1797 = vmatpush1.msra.mxu0 0.0
        %1798 = vmatprep.subr.mxu0 0.0
        %1799 = vmatpush1.msra.mxu0 0.0
        %1800 = vmatprep.subr.mxu0 0.0
        %1801 = vmatpush1.msra.mxu0 0.0
        %1802 = vmatprep.subr.mxu0 0.0
        %1803 = vmatpush1.msra.mxu0 0.0
        %1804 = vmatprep.subr.mxu0 0.0
        %1805 = vmatpush1.msra.mxu0 0.0
        %1806 = vmatprep.subr.mxu0 0.0
        %1807 = vmatpush1.msra.mxu0 0.0
        %1808 = vmatprep.subr.mxu0 0.0
        %1809 = vmatpush1.msra.mxu0 0.0
        %1810 = vmatprep.subr.mxu0 0.0
        %1811 = vmatpush1.msra.mxu0 0.0
        %1812 = vmatprep.subr.mxu0 0.0
        %1813 = vmatpush1.msra.mxu0 0.0
        %1814 = vmatprep.subr.mxu0 0.0
        %1815 = vmatpush1.msra.mxu0 0.0
        %1816 = vmatprep.subr.mxu0 0.0
        %1817 = vmatpush1.msra.mxu0 0.0
        %1818 = vmatprep.subr.mxu0 0.0
        %1819 = vmatpush1.msra.mxu0 0.0
        %1820 = vmatprep.subr.mxu0 0.0
        %1821 = vmatpush1.msra.mxu0 0.0
        %1822 = vmatprep.subr.mxu0 0.0
        %1823 = vmatpush1.msra.mxu0 0.0
        %1824 = vmatprep.subr.mxu0 0.0
        %1825 = vmatpush1.msra.mxu0 0.0
        %1826 = vmatprep.subr.mxu0 0.0
        %1827 = vmatpush1.msra.mxu0 0.0
        %1828 = vmatprep.subr.mxu0 0.0
        %1829 = vmatpush1.msra.mxu0 0.0
        %1830 = vmatprep.subr.mxu0 0.0
        %1831 = vmatpush1.msra.mxu0 0.0
        %1832 = vmatprep.subr.mxu0 0.0
        %1833 = vmatpush1.msra.mxu0 0.0
        %1834 = vmatprep.subr.mxu0 0.0
        %1835 = vmatpush1.msra.mxu0 0.0
        %1836 = vmatprep.subr.mxu0 0.0
        %1837 = vmatpush1.msra.mxu0 0.0
        %1838 = vmatprep.subr.mxu0 0.0
        %1839 = vmatpush1.msra.mxu0 0.0
        %1840 = vmatprep.subr.mxu0 0.0
        %1841 = vmatpush1.msra.mxu0 0.0
        %1842 = vmatprep.subr.mxu0 0.0
        %1843 = vmatpush1.msra.mxu0 0.0
        %1844 = vmatprep.subr.mxu0 0.0
        %1845 = vmatpush1.msra.mxu0 0.0
        %1846 = vmatprep.mubr.f32.mxu0 0.0
        %1847 = vmatmul.mubr.f32.gmra.mrb[0].mxu0 %v1777
        %v1848 = vpop.f32.mrb[0].mxu0
        %v1849 = vadd.f32 0.0, %v1848
        %v1850 = vpop.f32.mrb[0].mxu0
        %1851 = vmatprep.mubr.f32.mxu0 0.0
        %1852 = vmatmul.mubr.f32.gmra.mrb[0].mxu0 %v1780
        %v1853 = vpop.f32.mrb[0].mxu0
        %v1854 = vadd.f32 0.0, %v1853
        %v1855 = vpop.f32.mrb[0].mxu0
        %1856 = vdwg.mxu0
        %v1857 = vadd.f32 %v1770, %v1849
        %v1858 = vadd.f32 %v1771, %v1854
        %s1859 = sadd.s32 %s1516, 384
        %s1860 = scalar_lea.vmem [#allocation2], %s1859
        %v1861 = vld [vmem:[%s1860] sm:$0xff]
        %v1862 = vld [vmem:[%s1860 + $0x8] sm:$0xff]
        %v1864 = vsel %vm192, %v1502, 0
        %v1867 = vsel %vm192, %v1503, 0
        %1869 = vmatprep.subr.mxu0 0.0
        %1870 = vmatpush1.msra.mxu0 %v1861
        %1871 = vmatprep.subr.mxu0 0.0
        %1872 = vmatpush1.msra.mxu0 %v1862
        %1873 = vmatprep.subr.mxu0 0.0
        %1874 = vmatpush1.msra.mxu0 0.0
        %1875 = vmatprep.subr.mxu0 0.0
        %1876 = vmatpush1.msra.mxu0 0.0
        %1877 = vmatprep.subr.mxu0 0.0
        %1878 = vmatpush1.msra.mxu0 0.0
        %1879 = vmatprep.subr.mxu0 0.0
        %1880 = vmatpush1.msra.mxu0 0.0
        %1881 = vmatprep.subr.mxu0 0.0
        %1882 = vmatpush1.msra.mxu0 0.0
        %1883 = vmatprep.subr.mxu0 0.0
        %1884 = vmatpush1.msra.mxu0 0.0
        %1885 = vmatprep.subr.mxu0 0.0
        %1886 = vmatpush1.msra.mxu0 0.0
        %1887 = vmatprep.subr.mxu0 0.0
        %1888 = vmatpush1.msra.mxu0 0.0
        %1889 = vmatprep.subr.mxu0 0.0
        %1890 = vmatpush1.msra.mxu0 0.0
        %1891 = vmatprep.subr.mxu0 0.0
        %1892 = vmatpush1.msra.mxu0 0.0
        %1893 = vmatprep.subr.mxu0 0.0
        %1894 = vmatpush1.msra.mxu0 0.0
        %1895 = vmatprep.subr.mxu0 0.0
        %1896 = vmatpush1.msra.mxu0 0.0
        %1897 = vmatprep.subr.mxu0 0.0
        %1898 = vmatpush1.msra.mxu0 0.0
        %1899 = vmatprep.subr.mxu0 0.0
        %1900 = vmatpush1.msra.mxu0 0.0
        %1901 = vmatprep.subr.mxu0 0.0
        %1902 = vmatpush1.msra.mxu0 0.0
        %1903 = vmatprep.subr.mxu0 0.0
        %1904 = vmatpush1.msra.mxu0 0.0
        %1905 = vmatprep.subr.mxu0 0.0
        %1906 = vmatpush1.msra.mxu0 0.0
        %1907 = vmatprep.subr.mxu0 0.0
        %1908 = vmatpush1.msra.mxu0 0.0
        %1909 = vmatprep.subr.mxu0 0.0
        %1910 = vmatpush1.msra.mxu0 0.0
        %1911 = vmatprep.subr.mxu0 0.0
        %1912 = vmatpush1.msra.mxu0 0.0
        %1913 = vmatprep.subr.mxu0 0.0
        %1914 = vmatpush1.msra.mxu0 0.0
        %1915 = vmatprep.subr.mxu0 0.0
        %1916 = vmatpush1.msra.mxu0 0.0
        %1917 = vmatprep.subr.mxu0 0.0
        %1918 = vmatpush1.msra.mxu0 0.0
        %1919 = vmatprep.subr.mxu0 0.0
        %1920 = vmatpush1.msra.mxu0 0.0
        %1921 = vmatprep.subr.mxu0 0.0
        %1922 = vmatpush1.msra.mxu0 0.0
        %1923 = vmatprep.subr.mxu0 0.0
        %1924 = vmatpush1.msra.mxu0 0.0
        %1925 = vmatprep.subr.mxu0 0.0
        %1926 = vmatpush1.msra.mxu0 0.0
        %1927 = vmatprep.subr.mxu0 0.0
        %1928 = vmatpush1.msra.mxu0 0.0
        %1929 = vmatprep.subr.mxu0 0.0
        %1930 = vmatpush1.msra.mxu0 0.0
        %1931 = vmatprep.subr.mxu0 0.0
        %1932 = vmatpush1.msra.mxu0 0.0
        %1933 = vmatprep.mubr.f32.mxu0 0.0
        %1934 = vmatmul.mubr.f32.gmra.mrb[0].mxu0 %v1864
        %v1935 = vpop.f32.mrb[0].mxu0
        %v1936 = vadd.f32 0.0, %v1935
        %v1937 = vpop.f32.mrb[0].mxu0
        %1938 = vmatprep.mubr.f32.mxu0 0.0
        %1939 = vmatmul.mubr.f32.gmra.mrb[0].mxu0 %v1867
        %v1940 = vpop.f32.mrb[0].mxu0
        %v1941 = vadd.f32 0.0, %v1940
        %v1942 = vpop.f32.mrb[0].mxu0
        %1943 = vdwg.mxu0
        %v1944 = vadd.f32 %v1857, %v1936
        %v1945 = vadd.f32 %v1858, %v1941
        %s1946 = sadd.s32 %s1516, 512
        %s1947 = scalar_lea.vmem [#allocation2], %s1946
        %v1948 = vld [vmem:[%s1947] sm:$0xff]
        %v1949 = vld [vmem:[%s1947 + $0x8] sm:$0xff]
        %v1951 = vsel %vm192, %v1505, 0
        %v1954 = vsel %vm192, %v1506, 0
        %1956 = vmatprep.subr.mxu0 0.0
        %1957 = vmatpush1.msra.mxu0 %v1948
        %1958 = vmatprep.subr.mxu0 0.0
        %1959 = vmatpush1.msra.mxu0 %v1949
        %1960 = vmatprep.subr.mxu0 0.0
        %1961 = vmatpush1.msra.mxu0 0.0
        %1962 = vmatprep.subr.mxu0 0.0
        %1963 = vmatpush1.msra.mxu0 0.0
        %1964 = vmatprep.subr.mxu0 0.0
        %1965 = vmatpush1.msra.mxu0 0.0
        %1966 = vmatprep.subr.mxu0 0.0
        %1967 = vmatpush1.msra.mxu0 0.0
        %1968 = vmatprep.subr.mxu0 0.0
        %1969 = vmatpush1.msra.mxu0 0.0
        %1970 = vmatprep.subr.mxu0 0.0
        %1971 = vmatpush1.msra.mxu0 0.0
        %1972 = vmatprep.subr.mxu0 0.0
        %1973 = vmatpush1.msra.mxu0 0.0
        %1974 = vmatprep.subr.mxu0 0.0
        %1975 = vmatpush1.msra.mxu0 0.0
        %1976 = vmatprep.subr.mxu0 0.0
        %1977 = vmatpush1.msra.mxu0 0.0
        %1978 = vmatprep.subr.mxu0 0.0
        %1979 = vmatpush1.msra.mxu0 0.0
        %1980 = vmatprep.subr.mxu0 0.0
        %1981 = vmatpush1.msra.mxu0 0.0
        %1982 = vmatprep.subr.mxu0 0.0
        %1983 = vmatpush1.msra.mxu0 0.0
        %1984 = vmatprep.subr.mxu0 0.0
        %1985 = vmatpush1.msra.mxu0 0.0
        %1986 = vmatprep.subr.mxu0 0.0
        %1987 = vmatpush1.msra.mxu0 0.0
        %1988 = vmatprep.subr.mxu0 0.0
        %1989 = vmatpush1.msra.mxu0 0.0
        %1990 = vmatprep.subr.mxu0 0.0
        %1991 = vmatpush1.msra.mxu0 0.0
        %1992 = vmatprep.subr.mxu0 0.0
        %1993 = vmatpush1.msra.mxu0 0.0
        %1994 = vmatprep.subr.mxu0 0.0
        %1995 = vmatpush1.msra.mxu0 0.0
        %1996 = vmatprep.subr.mxu0 0.0
        %1997 = vmatpush1.msra.mxu0 0.0
        %1998 = vmatprep.subr.mxu0 0.0
        %1999 = vmatpush1.msra.mxu0 0.0
        %2000 = vmatprep.subr.mxu0 0.0
        %2001 = vmatpush1.msra.mxu0 0.0
        %2002 = vmatprep.subr.mxu0 0.0
        %2003 = vmatpush1.msra.mxu0 0.0
        %2004 = vmatprep.subr.mxu0 0.0
        %2005 = vmatpush1.msra.mxu0 0.0
        %2006 = vmatprep.subr.mxu0 0.0
        %2007 = vmatpush1.msra.mxu0 0.0
        %2008 = vmatprep.subr.mxu0 0.0
        %2009 = vmatpush1.msra.mxu0 0.0
        %2010 = vmatprep.subr.mxu0 0.0
        %2011 = vmatpush1.msra.mxu0 0.0
        %2012 = vmatprep.subr.mxu0 0.0
        %2013 = vmatpush1.msra.mxu0 0.0
        %2014 = vmatprep.subr.mxu0 0.0
        %2015 = vmatpush1.msra.mxu0 0.0
        %2016 = vmatprep.subr.mxu0 0.0
        %2017 = vmatpush1.msra.mxu0 0.0
        %2018 = vmatprep.subr.mxu0 0.0
        %2019 = vmatpush1.msra.mxu0 0.0
        %2020 = vmatprep.mubr.f32.mxu0 0.0
        %2021 = vmatmul.mubr.f32.gmra.mrb[0].mxu0 %v1951
        %v2022 = vpop.f32.mrb[0].mxu0
        %v2023 = vadd.f32 0.0, %v2022
        %v2024 = vpop.f32.mrb[0].mxu0
        %2025 = vmatprep.mubr.f32.mxu0 0.0
        %2026 = vmatmul.mubr.f32.gmra.mrb[0].mxu0 %v1954
        %v2027 = vpop.f32.mrb[0].mxu0
        %v2028 = vadd.f32 0.0, %v2027
        %v2029 = vpop.f32.mrb[0].mxu0
        %2030 = vdwg.mxu0
        %v2031 = vadd.f32 %v1944, %v2023
        %v2032 = vadd.f32 %v1945, %v2028
        %s2033 = sadd.s32 %s1516, 640
        %s2034 = scalar_lea.vmem [#allocation2], %s2033
        %v2035 = vld [vmem:[%s2034] sm:$0xff]
        %v2036 = vld [vmem:[%s2034 + $0x8] sm:$0xff]
        %v2038 = vsel %vm192, %v1508, 0
        %v2041 = vsel %vm192, %v1509, 0
        %2043 = vmatprep.subr.mxu0 0.0
        %2044 = vmatpush1.msra.mxu0 %v2035
        %2045 = vmatprep.subr.mxu0 0.0
        %2046 = vmatpush1.msra.mxu0 %v2036
        %2047 = vmatprep.subr.mxu0 0.0
        %2048 = vmatpush1.msra.mxu0 0.0
        %2049 = vmatprep.subr.mxu0 0.0
        %2050 = vmatpush1.msra.mxu0 0.0
        %2051 = vmatprep.subr.mxu0 0.0
        %2052 = vmatpush1.msra.mxu0 0.0
        %2053 = vmatprep.subr.mxu0 0.0
        %2054 = vmatpush1.msra.mxu0 0.0
        %2055 = vmatprep.subr.mxu0 0.0
        %2056 = vmatpush1.msra.mxu0 0.0
        %2057 = vmatprep.subr.mxu0 0.0
        %2058 = vmatpush1.msra.mxu0 0.0
        %2059 = vmatprep.subr.mxu0 0.0
        %2060 = vmatpush1.msra.mxu0 0.0
        %2061 = vmatprep.subr.mxu0 0.0
        %2062 = vmatpush1.msra.mxu0 0.0
        %2063 = vmatprep.subr.mxu0 0.0
        %2064 = vmatpush1.msra.mxu0 0.0
        %2065 = vmatprep.subr.mxu0 0.0
        %2066 = vmatpush1.msra.mxu0 0.0
        %2067 = vmatprep.subr.mxu0 0.0
        %2068 = vmatpush1.msra.mxu0 0.0
        %2069 = vmatprep.subr.mxu0 0.0
        %2070 = vmatpush1.msra.mxu0 0.0
        %2071 = vmatprep.subr.mxu0 0.0
        %2072 = vmatpush1.msra.mxu0 0.0
        %2073 = vmatprep.subr.mxu0 0.0
        %2074 = vmatpush1.msra.mxu0 0.0
        %2075 = vmatprep.subr.mxu0 0.0
        %2076 = vmatpush1.msra.mxu0 0.0
        %2077 = vmatprep.subr.mxu0 0.0
        %2078 = vmatpush1.msra.mxu0 0.0
        %2079 = vmatprep.subr.mxu0 0.0
        %2080 = vmatpush1.msra.mxu0 0.0
        %2081 = vmatprep.subr.mxu0 0.0
        %2082 = vmatpush1.msra.mxu0 0.0
        %2083 = vmatprep.subr.mxu0 0.0
        %2084 = vmatpush1.msra.mxu0 0.0
        %2085 = vmatprep.subr.mxu0 0.0
        %2086 = vmatpush1.msra.mxu0 0.0
        %2087 = vmatprep.subr.mxu0 0.0
        %2088 = vmatpush1.msra.mxu0 0.0
        %2089 = vmatprep.subr.mxu0 0.0
        %2090 = vmatpush1.msra.mxu0 0.0
        %2091 = vmatprep.subr.mxu0 0.0
        %2092 = vmatpush1.msra.mxu0 0.0
        %2093 = vmatprep.subr.mxu0 0.0
        %2094 = vmatpush1.msra.mxu0 0.0
        %2095 = vmatprep.subr.mxu0 0.0
        %2096 = vmatpush1.msra.mxu0 0.0
        %2097 = vmatprep.subr.mxu0 0.0
        %2098 = vmatpush1.msra.mxu0 0.0
        %2099 = vmatprep.subr.mxu0 0.0
        %2100 = vmatpush1.msra.mxu0 0.0
        %2101 = vmatprep.subr.mxu0 0.0
        %2102 = vmatpush1.msra.mxu0 0.0
        %2103 = vmatprep.subr.mxu0 0.0
        %2104 = vmatpush1.msra.mxu0 0.0
        %2105 = vmatprep.subr.mxu0 0.0
        %2106 = vmatpush1.msra.mxu0 0.0
        %2107 = vmatprep.mubr.f32.mxu0 0.0
        %2108 = vmatmul.mubr.f32.gmra.mrb[0].mxu0 %v2038
        %v2109 = vpop.f32.mrb[0].mxu0
        %v2110 = vadd.f32 0.0, %v2109
        %v2111 = vpop.f32.mrb[0].mxu0
        %2112 = vmatprep.mubr.f32.mxu0 0.0
        %2113 = vmatmul.mubr.f32.gmra.mrb[0].mxu0 %v2041
        %v2114 = vpop.f32.mrb[0].mxu0
        %v2115 = vadd.f32 0.0, %v2114
        %v2116 = vpop.f32.mrb[0].mxu0
        %2117 = vdwg.mxu0
        %v2118 = vadd.f32 %v2031, %v2110
        %v2119 = vadd.f32 %v2032, %v2115
        %s2120 = scalar_lea.vmem %s172, %s1516
        %2121 = vst.msk [vmem:[%s2120] sm:$0xff] %vm192, %v2118
        %2122 = vst.msk [vmem:[%s2120 + $0x8] sm:$0xff] %vm192, %v2119
      $region37: #{tpu_custom_call.1} parent=31 // loop_footer
        %s1515 = sadd.s32 1, %s1511
      $region38: #{tpu_custom_call.1} parent=31 // loop_footer_branch
        %1510 = sbr.rel target = $region34
      $region39: #{tpu_custom_call.1} parent=31 // loop_exit
        _
      %s2123 = smul.u32 16, %s14
      %p2124 = scmp.lt.s32.totalorder %s2123, 31
      %s2125 = scalar_select %p2124, %s2123, 31
      %s2126 = smul.addr %s2125, 8
      %s2127 = scalar_lea.vmem %s3, %s2126
      // Predicated region
      $region40: #{tpu_custom_call.1} parent=31 // pred_check
        %p2128 = pneg %p100
      $region41: #{tpu_custom_call.1} parent=31 // pred_check_branch
        %2130 = sbr.rel (%p2128) target = $region43
      $region42: #{tpu_custom_call.1} parent=31 // pred_region
        %s2131 = smul.u32 16, %s14
      $region43: #{tpu_custom_call.1} parent=31 // pred_fallthru
        _
    $region32: #{tpu_custom_call.1} parent=5 // pred_fallthru
      _
    %p2132 = scmp.le.s32.totalorder 2, %s9
    // Predicated region
    $region44: #{tpu_custom_call.1} parent=5 // pred_check
      %p2133 = pneg %p2132
    $region45: #{tpu_custom_call.1} parent=5 // pred_check_branch
      %2135 = sbr.rel (%p2133) target = $region47
    $region46: #{tpu_custom_call.1} parent=5 // pred_region
      %s2136 = ssub.s32 %s9, 2
      // Predicated region
      $region48: #{tpu_custom_call.1} parent=46 // pred_check
        %p2137 = pneg %p106
      $region49: #{tpu_custom_call.1} parent=46 // pred_check_branch
        %2139 = sbr.rel (%p2137) target = $region51
      $region50: #{tpu_custom_call.1} parent=46 // pred_region
        %s2140 = smul.u32 16, %s15
        %p2141 = scmp.lt.s32.totalorder %s2140, 31
        %s2142 = scalar_select %p2141, %s2140, 31
        %s2143 = smul.addr %s2142, 8
        %s2144 = scalar_lea.vmem %s3, %s2143
      $region51: #{tpu_custom_call.1} parent=46 // pred_fallthru
        _
    $region47: #{tpu_custom_call.1} parent=5 // pred_fallthru
      _
  $region6: #{tpu_custom_call.1} parent=0 // loop_footer
    %s13 = sadd.s32 1, %s9
  $region7: #{tpu_custom_call.1} parent=0 // loop_footer_branch
    %8 = sbr.rel target = $region3
  $region8: #{tpu_custom_call.1} parent=0 // loop_exit
    _

</llo_original>
